<compile_context>
chip_gen: v7x
topology: tpu7x:2x2x1
jax: 0.10.0
libtpu: 0.0.40
codegen_flags: <defaults>
</compile_context>

<pallas_src>
import jax
import jax.numpy as jnp
import numpy as np
from jax import lax
from jax.experimental import pallas as pl
from jax.experimental.pallas import tpu as pltpu

INPUT_DIM = 6
HIDDEN_DIM = 128
OUTPUT_DIM = 256
LN_EPS = 1e-5


def imu_encoder_kernel(
    x_ref,                      # [TB, S, C]        f32
    ln_g_ref, ln_b_ref,         # [1, C]            f32
    cw1p_ref, cb1p_ref,         # [3*C, H+O] f32, [1, H+O] f32  (conv1 ⊕ residual proj)
    cw2_ref, cb2_ref,           # [3, H, H] bf16, [1, H] f32
    w1_ref, b1_ref,             # [H, H] bf16,   [1, H] f32
    w2_ref, b2_ref,             # [H, H] bf16,   [1, H] f32
    w3_ref, b3_ref,             # [H, O] bf16,   [1, O] f32
    out_ref,                    # [TB, S, O]        f32
):
    TB, S, C = x_ref.shape
    H = w1_ref.shape[0]
    O = out_ref.shape[-1]
    R = TB * S                  # rows fed to every matmul (MXU M dimension)
    f32 = jnp.float32

    # ---- LayerNorm over the channel dim (row-wise, flatten B*S rows) ----
    x = x_ref[...].astype(f32).reshape(R, C)
    mean = jnp.mean(x, axis=-1, keepdims=True)
    cent = x - mean
    var = jnp.mean(cent * cent, axis=-1, keepdims=True)
    xn = cent * lax.rsqrt(var + LN_EPS) * ln_g_ref[...] + ln_b_ref[...]   # [R, C]

    # Sequence-boundary masks for the k=3 "same"-conv zero padding.  Rows are
    # flattened as r = b*S + s; rolled operands only leak across sequences at
    # s == 0 / s == S-1, exactly where the conv pads with zeros.
    s_pos = lax.broadcasted_iota(jnp.int32, (R, 1), 0) % S
    first_row = s_pos == 0
    last_row = s_pos == (S - 1)

    def shift_prev(a):   # row r <- a[r-1]; sequence-start rows <- 0
        return jnp.where(first_row, 0.0, pltpu.roll(a, shift=1, axis=0))

    def shift_next(a):   # row r <- a[r+1]; sequence-end rows <- 0
        return jnp.where(last_row, 0.0, pltpu.roll(a, shift=R - 1, axis=0))

    # ---- Conv1 (C->H, k=3, pad=1) fused with residual projection ----
    # One K = 3*C = 18 matmul with N = H + O = 384; lanes [:H] are the conv1
    # pre-activation, lanes [H:] are xn @ pw (the pw block only occupies the
    # center-tap rows of the packed weight, so the shifted taps contribute 0).
    cat = jnp.concatenate([shift_prev(xn), xn, shift_next(xn)], axis=-1)   # [R, 18]
    z = jnp.dot(cat, cw1p_ref[...], preferred_element_type=f32) + cb1p_ref[...]
    h = jnp.maximum(z[:, :H], 0.0)        # [R, H]  conv1 + ReLU
    res = z[:, H:]                        # [R, O]  residual projection (f32)

    # ---- Conv2 (H->H, k=3, pad=1): three per-tap accumulating matmuls ----
    dt2 = cw2_ref.dtype
    h2 = jnp.dot(shift_prev(h).astype(dt2), cw2_ref[0], preferred_element_type=f32)
    h2 = h2 + jnp.dot(h.astype(dt2), cw2_ref[1], preferred_element_type=f32)
    h2 = h2 + jnp.dot(shift_next(h).astype(dt2), cw2_ref[2], preferred_element_type=f32)
    h2 = jnp.maximum(h2 + cb2_ref[...], 0.0)                               # [R, H]

    # ---- Feature extractor MLP (Dropout == identity in eval) ----
    f = jnp.dot(h2.astype(w1_ref.dtype), w1_ref[...],
                preferred_element_type=f32) + b1_ref[...]
    f = jnp.maximum(f, 0.0)
    f = jnp.dot(f.astype(w2_ref.dtype), w2_ref[...],
                preferred_element_type=f32) + b2_ref[...]
    f = jnp.maximum(f, 0.0)
    f = jnp.dot(f.astype(w3_ref.dtype), w3_ref[...],
                preferred_element_type=f32) + b3_ref[...]
    f = jnp.maximum(f, 0.0)                                                # [R, O]

    out_ref[...] = (f + res).reshape(TB, S, O).astype(out_ref.dtype)


def _plan_tiles(B, S, target_rows, min_steps=2):
    """Pick sequences-per-step TB and a padded batch B_pad = k*TB.

    * TB*S targets ~target_rows rows per grid step (MXU row fill, amortized
      per-step overhead).
    * Keep >= min_steps grid steps when the batch allows so the batch axis can
      be sharded across both TensorCores on v7x.
    * Pad B up to a multiple of TB (wrapper slices the output) so awkward /
      prime batch sizes don't collapse to tiny grid steps.
    """
    tb = max(1, target_rows // max(S, 1))
    tb = min(tb, B)
    if B >= min_steps:
        tb = min(tb, max(1, B // min_steps))
    b_pad = pl.cdiv(B, tb) * tb
    return tb, b_pad


def imu_encoder(x, params, *, target_rows=1024, matmul_dtype=jnp.bfloat16):
    """x: [B, S, 6] float32 -> [B, S, OUTPUT_DIM] float32."""
    B, S, C = x.shape
    assert C == INPUT_DIM
    H, O = HIDDEN_DIM, OUTPUT_DIM
    f32 = jnp.float32

    TB, B_pad = _plan_tiles(B, S, target_rows)
    if B_pad != B:
        x = jnp.pad(x, ((0, B_pad - B), (0, 0), (0, 0)))
    grid = (B_pad // TB,)

    # Fuse conv1 taps into a wide-K weight and pack the residual projection
    # (pw on the center-tap rows, zeros elsewhere) into the same matrix.
    cw1 = params["cw1"].reshape(3 * C, H).astype(f32)                       # [18, H]
    pw_pad = jnp.zeros((3 * C, O), f32).at[C:2 * C, :].set(params["pw"].astype(f32))
    cw1p = jnp.concatenate([cw1, pw_pad], axis=-1)                          # [18, H+O]
    cb1p = jnp.concatenate([params["cb1"].astype(f32),
                            params["pb"].astype(f32)], axis=-1)             # [1, H+O]

    weights = [
        ("ln_g", params["ln_g"].astype(f32)),
        ("ln_b", params["ln_b"].astype(f32)),
        ("cw1p", cw1p),
        ("cb1p", cb1p),
        ("cw2", params["cw2"].astype(matmul_dtype)),     # [3, H, H], sliced per tap
        ("cb2", params["cb2"].astype(f32)),
        ("w1", params["w1"].astype(matmul_dtype)),
        ("b1", params["b1"].astype(f32)),
        ("w2", params["w2"].astype(matmul_dtype)),
        ("b2", params["b2"].astype(f32)),
        ("w3", params["w3"].astype(matmul_dtype)),
        ("b3", params["b3"].astype(f32)),
    ]

    def full_spec(arr):
        nd = arr.ndim
        return pl.BlockSpec(arr.shape, lambda b, _nd=nd: (0,) * _nd)

    in_specs = [pl.BlockSpec((TB, S, C), lambda b: (b, 0, 0))]
    in_specs += [full_spec(a) for _, a in weights]
    out_specs = pl.BlockSpec((TB, S, O), lambda b: (b, 0, 0))   # 256-lane dense

    fn = pl.pallas_call(
        imu_encoder_kernel,
        out_shape=jax.ShapeDtypeStruct((B_pad, S, O), jnp.float32),
        grid_spec=pltpu.PrefetchScalarGridSpec(
            num_scalar_prefetch=0,
            grid=grid,
            in_specs=in_specs,
            out_specs=out_specs,
        ),
        compiler_params=pltpu.CompilerParams(
            dimension_semantics=("parallel",)),
    )
    out = fn(x, *[a for _, a in weights])
    return out[:B] if B_pad != B else out


def make_params(key):
    """Deterministic synthetic parameters (shapes match the PyTorch module)."""
    H, O, C = HIDDEN_DIM, OUTPUT_DIM, INPUT_DIM
    keys = jax.random.split(key, 16)

    def w(k, shape, fan_in):
        return (jax.random.normal(k, shape, jnp.float32) / np.sqrt(fan_in)).astype(jnp.float32)

    return {
        "ln_g": jnp.ones((1, C), jnp.float32),
        "ln_b": jnp.zeros((1, C), jnp.float32),
        # Conv1d weights stored as [kernel_tap, Cin, Cout] (PyTorch [Cout, Cin, K]
        # transposed): tap k multiplies x[t - 1 + k].
        "cw1": w(keys[0], (3, C, H), 3 * C),
        "cb1": w(keys[1], (1, H), 3 * C),
        "cw2": w(keys[2], (3, H, H), 3 * H),
        "cb2": w(keys[3], (1, H), 3 * H),
        # Linear weights stored as [in, out] (PyTorch [out, in] transposed)
        "w1": w(keys[4], (H, H), H), "b1": w(keys[5], (1, H), H),
        "w2": w(keys[6], (H, H), H), "b2": w(keys[7], (1, H), H),
        "w3": w(keys[8], (H, O), H), "b3": w(keys[9], (1, O), H),
        "pw": w(keys[10], (C, O), C), "pb": w(keys[11], (1, O), C),
    }


def reference_forward(x, p, matmul_dtype=jnp.float32):
    """Pure-JAX reference of the PyTorch forward (eval mode).

    matmul_dtype controls operand precision of the conv2 / linear matmuls, so
    the bf16 kernel can also be checked against identical quantization.
    """
    mean = jnp.mean(x, axis=-1, keepdims=True)
    var = jnp.mean((x - mean) ** 2, axis=-1, keepdims=True)
    xn = (x - mean) / jnp.sqrt(var + LN_EPS) * p["ln_g"][0] + p["ln_b"][0]

    def conv1d_k3(a, w, b, dt):  # a: [B,S,Cin], w: [3,Cin,Cout]
        z = jnp.zeros_like(a[:, :1, :])
        a_m1 = jnp.concatenate([z, a[:, :-1, :]], axis=1)
        a_p1 = jnp.concatenate([a[:, 1:, :], z], axis=1)
        cat = jnp.concatenate([a_m1, a, a_p1], axis=-1).astype(dt)
        wf = w.reshape(-1, w.shape[-1]).astype(dt)
        return jnp.einsum("bsc,cd->bsd", cat, wf,
                          preferred_element_type=jnp.float32) + b[0]

    def lin(a, w, b, dt):
        return jnp.einsum("bsc,cd->bsd", a.astype(dt), w.astype(dt),
                          preferred_element_type=jnp.float32) + b[0]

    h = jax.nn.relu(conv1d_k3(xn, p["cw1"], p["cb1"], jnp.float32))
    h = jax.nn.relu(conv1d_k3(h, p["cw2"], p["cb2"], matmul_dtype))
    f = jax.nn.relu(lin(h, p["w1"], p["b1"], matmul_dtype))
    f = jax.nn.relu(lin(f, p["w2"], p["b2"], matmul_dtype))
    f = jax.nn.relu(lin(f, p["w3"], p["b3"], matmul_dtype))
    return f + (xn @ p["pw"] + p["pb"][0])


if __name__ == "__main__":
    key = jax.random.PRNGKey(0)
    k_x, k_p = jax.random.split(key)
    B, S = 2, 16
    x = jax.random.normal(k_x, (B, S, INPUT_DIM), jnp.float32)
    params = make_params(k_p)

    out = jax.block_until_ready(imu_encoder(x, params))
    assert out.shape == (B, S, OUTPUT_DIM)

    # Check 1: against a reference that applies the same bf16 quantization
    # (verifies the kernel math: taps, masks, conv1+residual fusion, per-tap conv2).
    ref_bf16 = jax.block_until_ready(reference_forward(x, params, jnp.bfloat16))
    np.testing.assert_allclose(np.asarray(out), np.asarray(ref_bf16),
                               rtol=1e-2, atol=1e-2)

    # Check 2: against the full-f32 PyTorch-equivalent math; looser tolerance
    # bounds the deliberate bf16 operand quantization of the big matmuls.
    ref_f32 = jax.block_until_ready(reference_forward(x, params, jnp.float32))
    np.testing.assert_allclose(np.asarray(out), np.asarray(ref_f32),
                               rtol=5e-2, atol=5e-2)

    print("KERNEL_OK")
</pallas_src>

<mosaic_0001>
module attributes {stable_mosaic.version = 11 : i64} {
  func.func @imu_encoder_kernel(%arg0: i32, %arg1: memref<1x16x6xf32, #tpu.memory_space<vmem>>, %arg2: memref<1x6xf32, #tpu.memory_space<vmem>>, %arg3: memref<1x6xf32, #tpu.memory_space<vmem>>, %arg4: memref<18x384xf32, #tpu.memory_space<vmem>>, %arg5: memref<1x384xf32, #tpu.memory_space<vmem>>, %arg6: memref<3x128x128xbf16, #tpu.memory_space<vmem>>, %arg7: memref<1x128xf32, #tpu.memory_space<vmem>>, %arg8: memref<128x128xbf16, #tpu.memory_space<vmem>>, %arg9: memref<1x128xf32, #tpu.memory_space<vmem>>, %arg10: memref<128x128xbf16, #tpu.memory_space<vmem>>, %arg11: memref<1x128xf32, #tpu.memory_space<vmem>>, %arg12: memref<128x256xbf16, #tpu.memory_space<vmem>>, %arg13: memref<1x256xf32, #tpu.memory_space<vmem>>, %arg14: memref<1x16x256xf32, #tpu.memory_space<vmem>>) attributes {dimension_semantics = [#tpu.dimension_semantics<parallel>], iteration_bounds = array<i64: 2>, scalar_prefetch = 0 : i64, scratch_operands = 0 : i64, tpu.core_type = #tpu.core_type<tc>, window_params = [{transform_indices = @transform_0, window_bounds = array<i64: 1, 16, 6>}, {pipeline_mode = #tpu.pipeline_mode<synchronous>, transform_indices = @transform_1, window_bounds = array<i64: 1, 6>}, {pipeline_mode = #tpu.pipeline_mode<synchronous>, transform_indices = @transform_2, window_bounds = array<i64: 1, 6>}, {pipeline_mode = #tpu.pipeline_mode<synchronous>, transform_indices = @transform_3, window_bounds = array<i64: 18, 384>}, {pipeline_mode = #tpu.pipeline_mode<synchronous>, transform_indices = @transform_4, window_bounds = array<i64: 1, 384>}, {pipeline_mode = #tpu.pipeline_mode<synchronous>, transform_indices = @transform_5, window_bounds = array<i64: 3, 128, 128>}, {pipeline_mode = #tpu.pipeline_mode<synchronous>, transform_indices = @transform_6, window_bounds = array<i64: 1, 128>}, {pipeline_mode = #tpu.pipeline_mode<synchronous>, transform_indices = @transform_7, window_bounds = array<i64: 128, 128>}, {pipeline_mode = #tpu.pipeline_mode<synchronous>, transform_indices = @transform_8, window_bounds = array<i64: 1, 128>}, {pipeline_mode = #tpu.pipeline_mode<synchronous>, transform_indices = @transform_9, window_bounds = array<i64: 128, 128>}, {pipeline_mode = #tpu.pipeline_mode<synchronous>, transform_indices = @transform_10, window_bounds = array<i64: 1, 128>}, {pipeline_mode = #tpu.pipeline_mode<synchronous>, transform_indices = @transform_11, window_bounds = array<i64: 128, 256>}, {pipeline_mode = #tpu.pipeline_mode<synchronous>, transform_indices = @transform_12, window_bounds = array<i64: 1, 256>}, {transform_indices = @transform_13, window_bounds = array<i64: 1, 16, 256>}]} {
    %c0 = arith.constant 0 : index
    %c0_0 = arith.constant 0 : index
    %c0_1 = arith.constant 0 : index
    %0 = vector.load %arg1[%c0, %c0_0, %c0_1] : memref<1x16x6xf32, #tpu.memory_space<vmem>>, vector<1x16x6xf32>
    %1 = vector.shape_cast %0 : vector<1x16x6xf32> to vector<16x6xf32>
    %cst = arith.constant dense<0.000000e+00> : vector<16xf32>
    %2 = vector.multi_reduction <add>, %1, %cst [1] : vector<16x6xf32> to vector<16xf32>
    %3 = vector.shape_cast %2 : vector<16xf32> to vector<16x1xf32>
    %cst_2 = arith.constant 6.000000e+00 : f32
    %4 = vector.broadcast %cst_2 : f32 to vector<16x1xf32>
    %5 = arith.divf %3, %4 : vector<16x1xf32>
    %6 = vector.broadcast %5 : vector<16x1xf32> to vector<16x6xf32>
    %7 = arith.subf %1, %6 : vector<16x6xf32>
    %8 = arith.mulf %7, %7 : vector<16x6xf32>
    %cst_3 = arith.constant dense<0.000000e+00> : vector<16xf32>
    %9 = vector.multi_reduction <add>, %8, %cst_3 [1] : vector<16x6xf32> to vector<16xf32>
    %10 = vector.shape_cast %9 : vector<16xf32> to vector<16x1xf32>
    %cst_4 = arith.constant 6.000000e+00 : f32
    %11 = vector.broadcast %cst_4 : f32 to vector<16x1xf32>
    %12 = arith.divf %10, %11 : vector<16x1xf32>
    %cst_5 = arith.constant 9.99999974E-6 : f32
    %13 = vector.broadcast %cst_5 : f32 to vector<16x1xf32>
    %14 = arith.addf %12, %13 : vector<16x1xf32>
    %15 = math.rsqrt %14 : vector<16x1xf32>
    %16 = vector.broadcast %15 : vector<16x1xf32> to vector<16x6xf32>
    %17 = arith.mulf %7, %16 : vector<16x6xf32>
    %c0_6 = arith.constant 0 : index
    %c0_7 = arith.constant 0 : index
    %18 = vector.load %arg2[%c0_6, %c0_7] : memref<1x6xf32, #tpu.memory_space<vmem>>, vector<1x6xf32>
    %19 = vector.broadcast %18 : vector<1x6xf32> to vector<16x6xf32>
    %20 = arith.mulf %17, %19 : vector<16x6xf32>
    %c0_8 = arith.constant 0 : index
    %c0_9 = arith.constant 0 : index
    %21 = vector.load %arg3[%c0_8, %c0_9] : memref<1x6xf32, #tpu.memory_space<vmem>>, vector<1x6xf32>
    %22 = vector.broadcast %21 : vector<1x6xf32> to vector<16x6xf32>
    %23 = arith.addf %20, %22 : vector<16x6xf32>
    %24 = tpu.iota {dimensions = array<i32: 0>} : vector<16x1xi32>
    %c16_i32 = arith.constant 16 : i32
    %c0_i32 = arith.constant 0 : i32
    %25 = arith.cmpi eq, %c16_i32, %c0_i32 : i32
    %c1_i32 = arith.constant 1 : i32
    %26 = arith.select %25, %c1_i32, %c16_i32 : i32
    %27 = vector.broadcast %26 : i32 to vector<16x1xi32>
    %28 = arith.remsi %24, %27 : vector<16x1xi32>
    %c0_i32_10 = arith.constant 0 : i32
    %29 = vector.broadcast %c0_i32_10 : i32 to vector<16x1xi32>
    %30 = arith.cmpi ne, %28, %29 : vector<16x1xi32>
    %c0_i32_11 = arith.constant 0 : i32
    %31 = vector.broadcast %c0_i32_11 : i32 to vector<16x1xi32>
    %32 = arith.cmpi slt, %28, %31 : vector<16x1xi32>
    %c0_i32_12 = arith.constant 0 : i32
    %33 = arith.cmpi slt, %26, %c0_i32_12 : i32
    %34 = vector.broadcast %33 : i1 to vector<16x1xi1>
    %35 = vector.broadcast %34 : vector<16x1xi1> to vector<16x1xi1>
    %36 = arith.xori %32, %35 : vector<16x1xi1>
    %37 = arith.andi %36, %30 : vector<16x1xi1>
    %38 = vector.broadcast %26 : i32 to vector<16x1xi32>
    %39 = arith.addi %28, %38 : vector<16x1xi32>
    %40 = arith.select %37, %39, %28 : vector<16x1xi1>, vector<16x1xi32>
    %c0_i32_13 = arith.constant 0 : i32
    %41 = vector.broadcast %c0_i32_13 : i32 to vector<16x1xi32>
    %42 = arith.cmpi eq, %40, %41 : vector<16x1xi32>
    %c15_i32 = arith.constant 15 : i32
    %43 = vector.broadcast %c15_i32 : i32 to vector<16x1xi32>
    %44 = arith.cmpi eq, %40, %43 : vector<16x1xi32>
    %c1_i32_14 = arith.constant 1 : i32
    %45 = tpu.dynamic_rotate %23 by %c1_i32_14 dim 0 : vector<16x6xf32>, i32 -> vector<16x6xf32>
    %cst_15 = arith.constant 0.000000e+00 : f32
    %46 = vector.shape_cast %42 : vector<16x1xi1> to vector<16x1xi1>
    %47 = vector.broadcast %46 : vector<16x1xi1> to vector<16x6xi1>
    %48 = vector.broadcast %cst_15 : f32 to vector<16x6xf32>
    %49 = arith.select %47, %48, %45 : vector<16x6xi1>, vector<16x6xf32>
    %c15_i32_16 = arith.constant 15 : i32
    %50 = tpu.dynamic_rotate %23 by %c15_i32_16 dim 0 : vector<16x6xf32>, i32 -> vector<16x6xf32>
    %cst_17 = arith.constant 0.000000e+00 : f32
    %51 = vector.shape_cast %44 : vector<16x1xi1> to vector<16x1xi1>
    %52 = vector.broadcast %51 : vector<16x1xi1> to vector<16x6xi1>
    %53 = vector.broadcast %cst_17 : f32 to vector<16x6xf32>
    %54 = arith.select %52, %53, %50 : vector<16x6xi1>, vector<16x6xf32>
    %55 = tpu.concatenate %49, %23, %54 in 1 : vector<16x6xf32>, vector<16x6xf32>, vector<16x6xf32> -> vector<16x18xf32>
    %c0_18 = arith.constant 0 : index
    %c0_19 = arith.constant 0 : index
    %56 = vector.load %arg4[%c0_18, %c0_19] : memref<18x384xf32, #tpu.memory_space<vmem>>, vector<18x384xf32>
    %cst_20 = arith.constant dense<0.000000e+00> : vector<16x384xf32>
    %57 = tpu.matmul %55, %56, %cst_20 {dimension_numbers = #tpu.dot_dimension_numbers<[1], [0], [0], [1], [0, 0, 1, 1], [], []>} : vector<16x18xf32>, vector<18x384xf32>, vector<16x384xf32> -> vector<16x384xf32>
    %c0_21 = arith.constant 0 : index
    %c0_22 = arith.constant 0 : index
    %58 = vector.load %arg5[%c0_21, %c0_22] : memref<1x384xf32, #tpu.memory_space<vmem>>, vector<1x384xf32>
    %59 = vector.broadcast %58 : vector<1x384xf32> to vector<16x384xf32>
    %60 = arith.addf %57, %59 : vector<16x384xf32>
    %61 = vector.extract_strided_slice %60 {offsets = [0, 0], sizes = [16, 128], strides = [1, 1]} : vector<16x384xf32> to vector<16x128xf32>
    %cst_23 = arith.constant 0.000000e+00 : f32
    %62 = vector.broadcast %cst_23 : f32 to vector<16x128xf32>
    %63 = arith.maximumf %61, %62 : vector<16x128xf32>
    %64 = vector.extract_strided_slice %60 {offsets = [0, 128], sizes = [16, 256], strides = [1, 1]} : vector<16x384xf32> to vector<16x256xf32>
    %c1_i32_24 = arith.constant 1 : i32
    %65 = tpu.dynamic_rotate %63 by %c1_i32_24 dim 0 : vector<16x128xf32>, i32 -> vector<16x128xf32>
    %cst_25 = arith.constant 0.000000e+00 : f32
    %66 = vector.shape_cast %42 : vector<16x1xi1> to vector<16x1xi1>
    %67 = vector.broadcast %66 : vector<16x1xi1> to vector<16x128xi1>
    %68 = vector.broadcast %cst_25 : f32 to vector<16x128xf32>
    %69 = arith.select %67, %68, %65 : vector<16x128xi1>, vector<16x128xf32>
    %70 = arith.truncf %69 : vector<16x128xf32> to vector<16x128xbf16>
    %c0_26 = arith.constant 0 : index
    %c0_27 = arith.constant 0 : index
    %c0_28 = arith.constant 0 : index
    %71 = vector.load %arg6[%c0_26, %c0_27, %c0_28] : memref<3x128x128xbf16, #tpu.memory_space<vmem>>, vector<1x128x128xbf16>
    %72 = vector.shape_cast %71 : vector<1x128x128xbf16> to vector<128x128xbf16>
    %cst_29 = arith.constant dense<0.000000e+00> : vector<16x128xf32>
    %73 = tpu.matmul %70, %72, %cst_29 {dimension_numbers = #tpu.dot_dimension_numbers<[1], [0], [0], [1], [0, 0, 1, 1], [], []>} : vector<16x128xbf16>, vector<128x128xbf16>, vector<16x128xf32> -> vector<16x128xf32>
    %74 = arith.truncf %63 : vector<16x128xf32> to vector<16x128xbf16>
    %c1 = arith.constant 1 : index
    %c0_30 = arith.constant 0 : index
    %c0_31 = arith.constant 0 : index
    %75 = vector.load %arg6[%c1, %c0_30, %c0_31] : memref<3x128x128xbf16, #tpu.memory_space<vmem>>, vector<1x128x128xbf16>
    %76 = vector.shape_cast %75 : vector<1x128x128xbf16> to vector<128x128xbf16>
    %cst_32 = arith.constant dense<0.000000e+00> : vector<16x128xf32>
    %77 = tpu.matmul %74, %76, %cst_32 {dimension_numbers = #tpu.dot_dimension_numbers<[1], [0], [0], [1], [0, 0, 1, 1], [], []>} : vector<16x128xbf16>, vector<128x128xbf16>, vector<16x128xf32> -> vector<16x128xf32>
    %78 = arith.addf %73, %77 : vector<16x128xf32>
    %c15_i32_33 = arith.constant 15 : i32
    %79 = tpu.dynamic_rotate %63 by %c15_i32_33 dim 0 : vector<16x128xf32>, i32 -> vector<16x128xf32>
    %cst_34 = arith.constant 0.000000e+00 : f32
    %80 = vector.shape_cast %44 : vector<16x1xi1> to vector<16x1xi1>
    %81 = vector.broadcast %80 : vector<16x1xi1> to vector<16x128xi1>
    %82 = vector.broadcast %cst_34 : f32 to vector<16x128xf32>
    %83 = arith.select %81, %82, %79 : vector<16x128xi1>, vector<16x128xf32>
    %84 = arith.truncf %83 : vector<16x128xf32> to vector<16x128xbf16>
    %c2 = arith.constant 2 : index
    %c0_35 = arith.constant 0 : index
    %c0_36 = arith.constant 0 : index
    %85 = vector.load %arg6[%c2, %c0_35, %c0_36] : memref<3x128x128xbf16, #tpu.memory_space<vmem>>, vector<1x128x128xbf16>
    %86 = vector.shape_cast %85 : vector<1x128x128xbf16> to vector<128x128xbf16>
    %cst_37 = arith.constant dense<0.000000e+00> : vector<16x128xf32>
    %87 = tpu.matmul %84, %86, %cst_37 {dimension_numbers = #tpu.dot_dimension_numbers<[1], [0], [0], [1], [0, 0, 1, 1], [], []>} : vector<16x128xbf16>, vector<128x128xbf16>, vector<16x128xf32> -> vector<16x128xf32>
    %88 = arith.addf %78, %87 : vector<16x128xf32>
    %c0_38 = arith.constant 0 : index
    %c0_39 = arith.constant 0 : index
    %89 = vector.load %arg7[%c0_38, %c0_39] : memref<1x128xf32, #tpu.memory_space<vmem>>, vector<1x128xf32>
    %90 = vector.broadcast %89 : vector<1x128xf32> to vector<16x128xf32>
    %91 = arith.addf %88, %90 : vector<16x128xf32>
    %cst_40 = arith.constant 0.000000e+00 : f32
    %92 = vector.broadcast %cst_40 : f32 to vector<16x128xf32>
    %93 = arith.maximumf %91, %92 : vector<16x128xf32>
    %94 = arith.truncf %93 : vector<16x128xf32> to vector<16x128xbf16>
    %c0_41 = arith.constant 0 : index
    %c0_42 = arith.constant 0 : index
    %95 = vector.load %arg8[%c0_41, %c0_42] : memref<128x128xbf16, #tpu.memory_space<vmem>>, vector<128x128xbf16>
    %cst_43 = arith.constant dense<0.000000e+00> : vector<16x128xf32>
    %96 = tpu.matmul %94, %95, %cst_43 {dimension_numbers = #tpu.dot_dimension_numbers<[1], [0], [0], [1], [0, 0, 1, 1], [], []>} : vector<16x128xbf16>, vector<128x128xbf16>, vector<16x128xf32> -> vector<16x128xf32>
    %c0_44 = arith.constant 0 : index
    %c0_45 = arith.constant 0 : index
    %97 = vector.load %arg9[%c0_44, %c0_45] : memref<1x128xf32, #tpu.memory_space<vmem>>, vector<1x128xf32>
    %98 = vector.broadcast %97 : vector<1x128xf32> to vector<16x128xf32>
    %99 = arith.addf %96, %98 : vector<16x128xf32>
    %cst_46 = arith.constant 0.000000e+00 : f32
    %100 = vector.broadcast %cst_46 : f32 to vector<16x128xf32>
    %101 = arith.maximumf %99, %100 : vector<16x128xf32>
    %102 = arith.truncf %101 : vector<16x128xf32> to vector<16x128xbf16>
    %c0_47 = arith.constant 0 : index
    %c0_48 = arith.constant 0 : index
    %103 = vector.load %arg10[%c0_47, %c0_48] : memref<128x128xbf16, #tpu.memory_space<vmem>>, vector<128x128xbf16>
    %cst_49 = arith.constant dense<0.000000e+00> : vector<16x128xf32>
    %104 = tpu.matmul %102, %103, %cst_49 {dimension_numbers = #tpu.dot_dimension_numbers<[1], [0], [0], [1], [0, 0, 1, 1], [], []>} : vector<16x128xbf16>, vector<128x128xbf16>, vector<16x128xf32> -> vector<16x128xf32>
    %c0_50 = arith.constant 0 : index
    %c0_51 = arith.constant 0 : index
    %105 = vector.load %arg11[%c0_50, %c0_51] : memref<1x128xf32, #tpu.memory_space<vmem>>, vector<1x128xf32>
    %106 = vector.broadcast %105 : vector<1x128xf32> to vector<16x128xf32>
    %107 = arith.addf %104, %106 : vector<16x128xf32>
    %cst_52 = arith.constant 0.000000e+00 : f32
    %108 = vector.broadcast %cst_52 : f32 to vector<16x128xf32>
    %109 = arith.maximumf %107, %108 : vector<16x128xf32>
    %110 = arith.truncf %109 : vector<16x128xf32> to vector<16x128xbf16>
    %c0_53 = arith.constant 0 : index
    %c0_54 = arith.constant 0 : index
    %111 = vector.load %arg12[%c0_53, %c0_54] : memref<128x256xbf16, #tpu.memory_space<vmem>>, vector<128x256xbf16>
    %cst_55 = arith.constant dense<0.000000e+00> : vector<16x256xf32>
    %112 = tpu.matmul %110, %111, %cst_55 {dimension_numbers = #tpu.dot_dimension_numbers<[1], [0], [0], [1], [0, 0, 1, 1], [], []>} : vector<16x128xbf16>, vector<128x256xbf16>, vector<16x256xf32> -> vector<16x256xf32>
    %c0_56 = arith.constant 0 : index
    %c0_57 = arith.constant 0 : index
    %113 = vector.load %arg13[%c0_56, %c0_57] : memref<1x256xf32, #tpu.memory_space<vmem>>, vector<1x256xf32>
    %114 = vector.broadcast %113 : vector<1x256xf32> to vector<16x256xf32>
    %115 = arith.addf %112, %114 : vector<16x256xf32>
    %cst_58 = arith.constant 0.000000e+00 : f32
    %116 = vector.broadcast %cst_58 : f32 to vector<16x256xf32>
    %117 = arith.maximumf %115, %116 : vector<16x256xf32>
    %118 = arith.addf %117, %64 : vector<16x256xf32>
    %119 = vector.shape_cast %118 : vector<16x256xf32> to vector<1x16x256xf32>
    %c0_59 = arith.constant 0 : index
    %c0_60 = arith.constant 0 : index
    %c0_61 = arith.constant 0 : index
    %120 = vector.load %arg14[%c0_59, %c0_60, %c0_61] : memref<1x16x256xf32, #tpu.memory_space<vmem>>, vector<1x16x256xf32>
    tpu.vector_store %arg14[%c0_59, %c0_60, %c0_61], %119 {strides = array<i32>} : memref<1x16x256xf32, #tpu.memory_space<vmem>>, vector<1x16x256xf32>,
    return
  }
  func.func @transform_0(%arg0: i32) -> (i32, i32, i32) {
    %c0_i32 = arith.constant 0 : i32
    %c0_i32_0 = arith.constant 0 : i32
    %c0_i32_1 = arith.constant 0 : i32
    return %arg0, %c0_i32, %c0_i32_0 : i32, i32, i32
  }
  func.func @transform_1(%arg0: i32) -> (i32, i32) {
    %c0_i32 = arith.constant 0 : i32
    %c0_i32_0 = arith.constant 0 : i32
    %c0_i32_1 = arith.constant 0 : i32
    return %c0_i32, %c0_i32_0 : i32, i32
  }
  func.func @transform_2(%arg0: i32) -> (i32, i32) {
    %c0_i32 = arith.constant 0 : i32
    %c0_i32_0 = arith.constant 0 : i32
    %c0_i32_1 = arith.constant 0 : i32
    return %c0_i32, %c0_i32_0 : i32, i32
  }
  func.func @transform_3(%arg0: i32) -> (i32, i32) {
    %c0_i32 = arith.constant 0 : i32
    %c0_i32_0 = arith.constant 0 : i32
    %c0_i32_1 = arith.constant 0 : i32
    return %c0_i32, %c0_i32_0 : i32, i32
  }
  func.func @transform_4(%arg0: i32) -> (i32, i32) {
    %c0_i32 = arith.constant 0 : i32
    %c0_i32_0 = arith.constant 0 : i32
    %c0_i32_1 = arith.constant 0 : i32
    return %c0_i32, %c0_i32_0 : i32, i32
  }
  func.func @transform_5(%arg0: i32) -> (i32, i32, i32) {
    %c0_i32 = arith.constant 0 : i32
    %c0_i32_0 = arith.constant 0 : i32
    %c0_i32_1 = arith.constant 0 : i32
    %c0_i32_2 = arith.constant 0 : i32
    return %c0_i32, %c0_i32_0, %c0_i32_1 : i32, i32, i32
  }
  func.func @transform_6(%arg0: i32) -> (i32, i32) {
    %c0_i32 = arith.constant 0 : i32
    %c0_i32_0 = arith.constant 0 : i32
    %c0_i32_1 = arith.constant 0 : i32
    return %c0_i32, %c0_i32_0 : i32, i32
  }
  func.func @transform_7(%arg0: i32) -> (i32, i32) {
    %c0_i32 = arith.constant 0 : i32
    %c0_i32_0 = arith.constant 0 : i32
    %c0_i32_1 = arith.constant 0 : i32
    return %c0_i32, %c0_i32_0 : i32, i32
  }
  func.func @transform_8(%arg0: i32) -> (i32, i32) {
    %c0_i32 = arith.constant 0 : i32
    %c0_i32_0 = arith.constant 0 : i32
    %c0_i32_1 = arith.constant 0 : i32
    return %c0_i32, %c0_i32_0 : i32, i32
  }
  func.func @transform_9(%arg0: i32) -> (i32, i32) {
    %c0_i32 = arith.constant 0 : i32
    %c0_i32_0 = arith.constant 0 : i32
    %c0_i32_1 = arith.constant 0 : i32
    return %c0_i32, %c0_i32_0 : i32, i32
  }
  func.func @transform_10(%arg0: i32) -> (i32, i32) {
    %c0_i32 = arith.constant 0 : i32
    %c0_i32_0 = arith.constant 0 : i32
    %c0_i32_1 = arith.constant 0 : i32
    return %c0_i32, %c0_i32_0 : i32, i32
  }
  func.func @transform_11(%arg0: i32) -> (i32, i32) {
    %c0_i32 = arith.constant 0 : i32
    %c0_i32_0 = arith.constant 0 : i32
    %c0_i32_1 = arith.constant 0 : i32
    return %c0_i32, %c0_i32_0 : i32, i32
  }
  func.func @transform_12(%arg0: i32) -> (i32, i32) {
    %c0_i32 = arith.constant 0 : i32
    %c0_i32_0 = arith.constant 0 : i32
    %c0_i32_1 = arith.constant 0 : i32
    return %c0_i32, %c0_i32_0 : i32, i32
  }
  func.func @transform_13(%arg0: i32) -> (i32, i32, i32) {
    %c0_i32 = arith.constant 0 : i32
    %c0_i32_0 = arith.constant 0 : i32
    %c0_i32_1 = arith.constant 0 : i32
    return %arg0, %c0_i32, %c0_i32_0 : i32, i32, i32
  }
}

</mosaic_0001>

<llo_original>
// kernel: tpu_custom_call.1
$region0: #{tpu_custom_call.1}
  #allocation0 [shape = 'u32[]', space=smem, size = 0x4, offset = 0x4, fixed_abs, tag = 'smem constant byte address 0x4 - core index']
  #allocation1 [shape = 'u32[144,128]{1,0:T(1,128)}', space=vmem, size = 0x12000, scoped, tag = 'internal scratch']
  %s0 = inlined_call_operand.vmem [shape: f32[2,16,6], index: 0, kind: input, shape index: {}]
  %s1 = inlined_call_operand.vmem [shape: f32[1,6], index: 1, kind: input, shape index: {}]
  %s2 = inlined_call_operand.hbm [shape: f32[1,6], index: 2, kind: input, shape index: {}]
  %s3 = inlined_call_operand.hbm [shape: f32[18,384], index: 3, kind: input, shape index: {}]
  %s4 = inlined_call_operand.vmem [shape: f32[1,384], index: 4, kind: input, shape index: {}]
  %s5 = inlined_call_operand.hbm [shape: bf16[3,128,128], index: 5, kind: input, shape index: {}]
  %s6 = inlined_call_operand.hbm [shape: f32[1,128], index: 6, kind: input, shape index: {}]
  %s7 = inlined_call_operand.vmem [shape: bf16[128,128], index: 7, kind: input, shape index: {}]
  %s8 = inlined_call_operand.vmem [shape: f32[1,128], index: 8, kind: input, shape index: {}]
  %s9 = inlined_call_operand.hbm [shape: bf16[128,128], index: 9, kind: input, shape index: {}]
  %s10 = inlined_call_operand.vmem [shape: f32[1,128], index: 10, kind: input, shape index: {}]
  %s11 = inlined_call_operand.hbm [shape: bf16[128,256], index: 11, kind: input, shape index: {}]
  %s12 = inlined_call_operand.vmem [shape: f32[1,256], index: 12, kind: input, shape index: {}]
  %s13 = inlined_call_operand.hbm [shape: f32[2,16,256], index: 13, kind: output, shape index: {}]
  %s14 = sld [smem:[#allocation0]]
  $region109: #{tpu_custom_call.1} parent=0
    _
  %s16 = ssub.s32 1, %s14
  %s17 = scalar_select 0, %s16, %s14
  $region1: #{tpu_custom_call.1} parent=0
    #allocation2 [shape = 'u8[512]{0}', space=vmem, size = 0x400, scoped, tag = 'input window, operand 2, single buffered']
    #allocation3 [shape = 's32[2]{0}', space=sflag, size = 0x8, scoped, tag = 'scoped memory for tpu_custom_call.1']
    #allocation4 [shape = 's32[2]{0}', space=sflag, size = 0x8, scoped, tag = 'scoped memory for tpu_custom_call.1']
    #allocation5 [shape = 'u8[36864]{0}', space=vmem, size = 0x9000, scoped, tag = 'input window, operand 3, single buffered']
    #allocation6 [shape = 's32[1]{0}', space=sflag, size = 0x4, scoped, tag = 'scoped memory for tpu_custom_call.1']
    #allocation7 [shape = 'u8[98304]{0}', space=vmem, size = 0x18000, scoped, tag = 'input window, operand 5, single buffered']
    #allocation8 [shape = 'u8[512]{0}', space=vmem, size = 0x400, scoped, tag = 'input window, operand 6, single buffered']
    #allocation9 [shape = 's32[1]{0}', space=sflag, size = 0x4, scoped, tag = 'scoped memory for tpu_custom_call.1']
    #allocation10 [shape = 'u8[32768]{0}', space=vmem, size = 0x8000, scoped, tag = 'input window, operand 9, single buffered']
    #allocation11 [shape = 'u8[65536]{0}', space=vmem, size = 0x10000, scoped, tag = 'input window, operand 11, single buffered']
    #allocation12 [shape = 's32[1]{0}', space=sflag, size = 0x4, scoped, tag = 'scoped memory for tpu_custom_call.1']
    #allocation13 [shape = 'u8[32768]{0}', space=vmem, size = 0x8000, scoped, tag = 'output window, operand 0']
    %18 = vsyncpa [#allocation3], 0
    %19 = vsyncpa [#allocation6], 0
    %20 = vsyncpa [#allocation9], 0
    %21 = vsyncpa [#allocation12], 0
    %22 = vsyncpa [#allocation4], 0
    %s23 = scalar_lea.sflag [#allocation4], 1
    %24 = vsyncpa %s23, 0
    loop: start=0, step=1, limit=4
    $region2: #{tpu_custom_call.1} parent=1 // loop_pre_header
      _
    $region3: #{tpu_custom_call.1} parent=1 // loop_header
      %s26 = sphi 0, %s30
      %p27 = scmp.ge.s32.totalorder %s26, 4
      %s36 = sphi 0, %s38
      %s39 = sphi 0, %s36
      %s40 = sphi 0, %s39
      %s56 = sphi 0, %s40
      %s60 = sphi 0, %s60
      %s62 = sphi 0, %s60
      %s63 = sphi 0, %s62
      %s77 = sphi 0, %s63
      %s81 = sphi 0, %s81
      %s83 = sphi 0, %s81
      %s84 = sphi 0, %s83
      %s98 = sphi 0, %s84
      %s102 = sphi 0, %s102
      %s104 = sphi 0, %s102
      %s105 = sphi 0, %s104
      %s119 = sphi 0, %s105
      %s123 = sphi 0, %s123
      %s125 = sphi 0, %s123
      %s126 = sphi 0, %s125
      %s140 = sphi 0, %s126
      %s144 = sphi 0, %s144
      %s146 = sphi 0, %s144
      %s147 = sphi 0, %s146
      %s161 = sphi 0, %s147
      %s165 = sphi 0, %s165
      %s167 = sphi 0, %s165
      %s168 = sphi 0, %s167
      %s182 = sphi 0, %s168
      %s186 = sphi 0, %s186
      %s188 = sphi 0, %s186
      %s189 = sphi 0, %s188
      %s203 = sphi 0, %s189
      %s207 = sphi 0, %s207
      %s209 = sphi 0, %s207
      %s210 = sphi 0, %s209
      %s224 = sphi 0, %s210
      %s228 = sphi 0, %s228
      %s230 = sphi 0, %s228
      %s231 = sphi 0, %s230
      %s245 = sphi 0, %s231
      %s249 = sphi 0, %s249
      %s251 = sphi 0, %s249
      %s252 = sphi 0, %s251
      %s266 = sphi 0, %s252
      %s270 = sphi 0, %s270
      %s272 = sphi 0, %s270
      %s273 = sphi 0, %s272
      %s287 = sphi 0, %s273
      %s291 = sphi 0, %s291
      %s293 = sphi 0, %s291
      %s294 = sphi 0, %s293
      %s308 = sphi 0, %s294
      %s314 = sphi 0, %s316
      %s317 = sphi 0, %s314
      %s318 = sphi 0, %s317
      %s334 = sphi 0, %s318
    $region4: #{tpu_custom_call.1} parent=1 // loop_header_branch
      %29 = sbr.rel (%p27) target = $region8
    $region5: #{tpu_custom_call.1} parent=1 // loop_body
      %s31 = ssub.s32 %s26, 1
      %s32 = ssub.s32 %s26, 2
      %s33 = sadd.s32 %s26, 1
      %s34 = ssub.s32 %s26, %s33
      %p35 = scmp.eq.s32.totalorder %s34, 0
      %s37 = sadd.s32 %s36, 1
      %s38 = scalar_select %p35, %s36, %s37
      %p41 = pneg %p35
      %p42 = scmp.eq.s32.totalorder %s26, 1
      %p43 = por %p41, %p42
      %p44 = scmp.ne.s32.totalorder %s36, %s39
      %p45 = scmp.eq.s32.totalorder %s26, 0
      %p46 = por %p44, %p45
      %p47 = scmp.ne.s32.totalorder %s36, %s39
      %p48 = scmp.eq.s32.totalorder %s31, 1
      %p49 = por %p47, %p48
      %p50 = scmp.ne.s32.totalorder %s39, %s40
      %p51 = scmp.eq.s32.totalorder %s31, 0
      %p52 = por %p50, %p51
      %p53 = scmp.ne.s32.totalorder %s39, %s40
      %p54 = scmp.eq.s32.totalorder %s32, 1
      %p55 = por %p53, %p54
      %p57 = scmp.ne.s32.totalorder %s40, %s56
      %p58 = scmp.eq.s32.totalorder %s32, 0
      %p59 = por %p57, %p58
      %s61 = sadd.s32 %s60, 1
      %p64 = scmp.eq.s32.totalorder %s26, 1
      %p65 = scmp.ne.s32.totalorder %s60, %s62
      %p66 = scmp.eq.s32.totalorder %s26, 0
      %p67 = por %p65, %p66
      %p68 = scmp.ne.s32.totalorder %s60, %s62
      %p69 = scmp.eq.s32.totalorder %s31, 1
      %p70 = por %p68, %p69
      %p71 = scmp.ne.s32.totalorder %s62, %s63
      %p72 = scmp.eq.s32.totalorder %s31, 0
      %p73 = por %p71, %p72
      %p74 = scmp.ne.s32.totalorder %s62, %s63
      %p75 = scmp.eq.s32.totalorder %s32, 1
      %p76 = por %p74, %p75
      %p78 = scmp.ne.s32.totalorder %s63, %s77
      %p79 = scmp.eq.s32.totalorder %s32, 0
      %p80 = por %p78, %p79
      %s82 = sadd.s32 %s81, 1
      %p85 = scmp.eq.s32.totalorder %s26, 1
      %p86 = scmp.ne.s32.totalorder %s81, %s83
      %p87 = scmp.eq.s32.totalorder %s26, 0
      %p88 = por %p86, %p87
      %p89 = scmp.ne.s32.totalorder %s81, %s83
      %p90 = scmp.eq.s32.totalorder %s31, 1
      %p91 = por %p89, %p90
      %p92 = scmp.ne.s32.totalorder %s83, %s84
      %p93 = scmp.eq.s32.totalorder %s31, 0
      %p94 = por %p92, %p93
      %p95 = scmp.ne.s32.totalorder %s83, %s84
      %p96 = scmp.eq.s32.totalorder %s32, 1
      %p97 = por %p95, %p96
      %p99 = scmp.ne.s32.totalorder %s84, %s98
      %p100 = scmp.eq.s32.totalorder %s32, 0
      %p101 = por %p99, %p100
      %s103 = sadd.s32 %s102, 1
      %p106 = scmp.eq.s32.totalorder %s26, 1
      %p107 = scmp.ne.s32.totalorder %s102, %s104
      %p108 = scmp.eq.s32.totalorder %s26, 0
      %p109 = por %p107, %p108
      %p110 = scmp.ne.s32.totalorder %s102, %s104
      %p111 = scmp.eq.s32.totalorder %s31, 1
      %p112 = por %p110, %p111
      %p113 = scmp.ne.s32.totalorder %s104, %s105
      %p114 = scmp.eq.s32.totalorder %s31, 0
      %p115 = por %p113, %p114
      %p116 = scmp.ne.s32.totalorder %s104, %s105
      %p117 = scmp.eq.s32.totalorder %s32, 1
      %p118 = por %p116, %p117
      %p120 = scmp.ne.s32.totalorder %s105, %s119
      %p121 = scmp.eq.s32.totalorder %s32, 0
      %p122 = por %p120, %p121
      %s124 = sadd.s32 %s123, 1
      %p127 = scmp.eq.s32.totalorder %s26, 1
      %p128 = scmp.ne.s32.totalorder %s123, %s125
      %p129 = scmp.eq.s32.totalorder %s26, 0
      %p130 = por %p128, %p129
      %p131 = scmp.ne.s32.totalorder %s123, %s125
      %p132 = scmp.eq.s32.totalorder %s31, 1
      %p133 = por %p131, %p132
      %p134 = scmp.ne.s32.totalorder %s125, %s126
      %p135 = scmp.eq.s32.totalorder %s31, 0
      %p136 = por %p134, %p135
      %p137 = scmp.ne.s32.totalorder %s125, %s126
      %p138 = scmp.eq.s32.totalorder %s32, 1
      %p139 = por %p137, %p138
      %p141 = scmp.ne.s32.totalorder %s126, %s140
      %p142 = scmp.eq.s32.totalorder %s32, 0
      %p143 = por %p141, %p142
      %s145 = sadd.s32 %s144, 1
      %p148 = scmp.eq.s32.totalorder %s26, 1
      %p149 = scmp.ne.s32.totalorder %s144, %s146
      %p150 = scmp.eq.s32.totalorder %s26, 0
      %p151 = por %p149, %p150
      %p152 = scmp.ne.s32.totalorder %s144, %s146
      %p153 = scmp.eq.s32.totalorder %s31, 1
      %p154 = por %p152, %p153
      %p155 = scmp.ne.s32.totalorder %s146, %s147
      %p156 = scmp.eq.s32.totalorder %s31, 0
      %p157 = por %p155, %p156
      %p158 = scmp.ne.s32.totalorder %s146, %s147
      %p159 = scmp.eq.s32.totalorder %s32, 1
      %p160 = por %p158, %p159
      %p162 = scmp.ne.s32.totalorder %s147, %s161
      %p163 = scmp.eq.s32.totalorder %s32, 0
      %p164 = por %p162, %p163
      %s166 = sadd.s32 %s165, 1
      %p169 = scmp.eq.s32.totalorder %s26, 1
      %p170 = scmp.ne.s32.totalorder %s165, %s167
      %p171 = scmp.eq.s32.totalorder %s26, 0
      %p172 = por %p170, %p171
      %p173 = scmp.ne.s32.totalorder %s165, %s167
      %p174 = scmp.eq.s32.totalorder %s31, 1
      %p175 = por %p173, %p174
      %p176 = scmp.ne.s32.totalorder %s167, %s168
      %p177 = scmp.eq.s32.totalorder %s31, 0
      %p178 = por %p176, %p177
      %p179 = scmp.ne.s32.totalorder %s167, %s168
      %p180 = scmp.eq.s32.totalorder %s32, 1
      %p181 = por %p179, %p180
      %p183 = scmp.ne.s32.totalorder %s168, %s182
      %p184 = scmp.eq.s32.totalorder %s32, 0
      %p185 = por %p183, %p184
      %s187 = sadd.s32 %s186, 1
      %p190 = scmp.eq.s32.totalorder %s26, 1
      %p191 = scmp.ne.s32.totalorder %s186, %s188
      %p192 = scmp.eq.s32.totalorder %s26, 0
      %p193 = por %p191, %p192
      %p194 = scmp.ne.s32.totalorder %s186, %s188
      %p195 = scmp.eq.s32.totalorder %s31, 1
      %p196 = por %p194, %p195
      %p197 = scmp.ne.s32.totalorder %s188, %s189
      %p198 = scmp.eq.s32.totalorder %s31, 0
      %p199 = por %p197, %p198
      %p200 = scmp.ne.s32.totalorder %s188, %s189
      %p201 = scmp.eq.s32.totalorder %s32, 1
      %p202 = por %p200, %p201
      %p204 = scmp.ne.s32.totalorder %s189, %s203
      %p205 = scmp.eq.s32.totalorder %s32, 0
      %p206 = por %p204, %p205
      %s208 = sadd.s32 %s207, 1
      %p211 = scmp.eq.s32.totalorder %s26, 1
      %p212 = scmp.ne.s32.totalorder %s207, %s209
      %p213 = scmp.eq.s32.totalorder %s26, 0
      %p214 = por %p212, %p213
      %p215 = scmp.ne.s32.totalorder %s207, %s209
      %p216 = scmp.eq.s32.totalorder %s31, 1
      %p217 = por %p215, %p216
      %p218 = scmp.ne.s32.totalorder %s209, %s210
      %p219 = scmp.eq.s32.totalorder %s31, 0
      %p220 = por %p218, %p219
      %p221 = scmp.ne.s32.totalorder %s209, %s210
      %p222 = scmp.eq.s32.totalorder %s32, 1
      %p223 = por %p221, %p222
      %p225 = scmp.ne.s32.totalorder %s210, %s224
      %p226 = scmp.eq.s32.totalorder %s32, 0
      %p227 = por %p225, %p226
      %s229 = sadd.s32 %s228, 1
      %p232 = scmp.eq.s32.totalorder %s26, 1
      %p233 = scmp.ne.s32.totalorder %s228, %s230
      %p234 = scmp.eq.s32.totalorder %s26, 0
      %p235 = por %p233, %p234
      %p236 = scmp.ne.s32.totalorder %s228, %s230
      %p237 = scmp.eq.s32.totalorder %s31, 1
      %p238 = por %p236, %p237
      %p239 = scmp.ne.s32.totalorder %s230, %s231
      %p240 = scmp.eq.s32.totalorder %s31, 0
      %p241 = por %p239, %p240
      %p242 = scmp.ne.s32.totalorder %s230, %s231
      %p243 = scmp.eq.s32.totalorder %s32, 1
      %p244 = por %p242, %p243
      %p246 = scmp.ne.s32.totalorder %s231, %s245
      %p247 = scmp.eq.s32.totalorder %s32, 0
      %p248 = por %p246, %p247
      %s250 = sadd.s32 %s249, 1
      %p253 = scmp.eq.s32.totalorder %s26, 1
      %p254 = scmp.ne.s32.totalorder %s249, %s251
      %p255 = scmp.eq.s32.totalorder %s26, 0
      %p256 = por %p254, %p255
      %p257 = scmp.ne.s32.totalorder %s249, %s251
      %p258 = scmp.eq.s32.totalorder %s31, 1
      %p259 = por %p257, %p258
      %p260 = scmp.ne.s32.totalorder %s251, %s252
      %p261 = scmp.eq.s32.totalorder %s31, 0
      %p262 = por %p260, %p261
      %p263 = scmp.ne.s32.totalorder %s251, %s252
      %p264 = scmp.eq.s32.totalorder %s32, 1
      %p265 = por %p263, %p264
      %p267 = scmp.ne.s32.totalorder %s252, %s266
      %p268 = scmp.eq.s32.totalorder %s32, 0
      %p269 = por %p267, %p268
      %s271 = sadd.s32 %s270, 1
      %p274 = scmp.eq.s32.totalorder %s26, 1
      %p275 = scmp.ne.s32.totalorder %s270, %s272
      %p276 = scmp.eq.s32.totalorder %s26, 0
      %p277 = por %p275, %p276
      %p278 = scmp.ne.s32.totalorder %s270, %s272
      %p279 = scmp.eq.s32.totalorder %s31, 1
      %p280 = por %p278, %p279
      %p281 = scmp.ne.s32.totalorder %s272, %s273
      %p282 = scmp.eq.s32.totalorder %s31, 0
      %p283 = por %p281, %p282
      %p284 = scmp.ne.s32.totalorder %s272, %s273
      %p285 = scmp.eq.s32.totalorder %s32, 1
      %p286 = por %p284, %p285
      %p288 = scmp.ne.s32.totalorder %s273, %s287
      %p289 = scmp.eq.s32.totalorder %s32, 0
      %p290 = por %p288, %p289
      %s292 = sadd.s32 %s291, 1
      %p295 = scmp.eq.s32.totalorder %s26, 1
      %p296 = scmp.ne.s32.totalorder %s291, %s293
      %p297 = scmp.eq.s32.totalorder %s26, 0
      %p298 = por %p296, %p297
      %p299 = scmp.ne.s32.totalorder %s291, %s293
      %p300 = scmp.eq.s32.totalorder %s31, 1
      %p301 = por %p299, %p300
      %p302 = scmp.ne.s32.totalorder %s293, %s294
      %p303 = scmp.eq.s32.totalorder %s31, 0
      %p304 = por %p302, %p303
      %p305 = scmp.ne.s32.totalorder %s293, %s294
      %p306 = scmp.eq.s32.totalorder %s32, 1
      %p307 = por %p305, %p306
      %p309 = scmp.ne.s32.totalorder %s294, %s308
      %p310 = scmp.eq.s32.totalorder %s32, 0
      %p311 = por %p309, %p310
      %s312 = ssub.s32 %s26, %s33
      %p313 = scmp.eq.s32.totalorder %s312, 0
      %s315 = sadd.s32 %s314, 1
      %s316 = scalar_select %p313, %s314, %s315
      %p319 = pneg %p313
      %p320 = scmp.eq.s32.totalorder %s26, 1
      %p321 = por %p319, %p320
      %p322 = scmp.ne.s32.totalorder %s314, %s317
      %p323 = scmp.eq.s32.totalorder %s26, 0
      %p324 = por %p322, %p323
      %p325 = scmp.ne.s32.totalorder %s314, %s317
      %p326 = scmp.eq.s32.totalorder %s31, 1
      %p327 = por %p325, %p326
      %p328 = scmp.ne.s32.totalorder %s317, %s318
      %p329 = scmp.eq.s32.totalorder %s31, 0
      %p330 = por %p328, %p329
      %p331 = scmp.ne.s32.totalorder %s317, %s318
      %p332 = scmp.eq.s32.totalorder %s32, 1
      %p333 = por %p331, %p332
      %p335 = scmp.ne.s32.totalorder %s318, %s334
      %p336 = scmp.eq.s32.totalorder %s32, 0
      %p337 = por %p335, %p336
      %p338 = scmp.le.s32.totalorder 1, %s26
      %p339 = scmp.lt.s32.totalorder %s26, 3
      %p340 = pnand %p338, %p339
      %p341 = pneg %p340
      // Predicated region
      $region9: #{tpu_custom_call.1} parent=5 // pred_check
        _
      $region10: #{tpu_custom_call.1} parent=5 // pred_check_branch
        %343 = sbr.rel (%p340) target = $region12
      $region11: #{tpu_custom_call.1} parent=5 // pred_region
        %s344 = ssub.s32 %s26, 1
        // Predicated region
        $region13: #{tpu_custom_call.1} parent=11 // pred_check
          %p345 = pneg %p73
        $region14: #{tpu_custom_call.1} parent=11 // pred_check_branch
          %347 = sbr.rel (%p345) target = $region16
        $region15: #{tpu_custom_call.1} parent=11 // pred_region
          _
        $region16: #{tpu_custom_call.1} parent=11 // pred_fallthru
          _
        // Predicated region
        $region17: #{tpu_custom_call.1} parent=11 // pred_check
          %p348 = pneg %p94
        $region18: #{tpu_custom_call.1} parent=11 // pred_check_branch
          %350 = sbr.rel (%p348) target = $region20
        $region19: #{tpu_custom_call.1} parent=11 // pred_region
          %s352 = ssub.s32 16, 16
          %353 = vsyncadd [#allocation3], %s352
          %s355 = sshll.u32 [#allocation2], 4
          %s356 = int_to_ptr.vmem [resolvable:$true] %s355
          %358 = dma.hbm_to_vmem [thread:$0]  %s2, 16, %s356, [#allocation3]
        $region20: #{tpu_custom_call.1} parent=11 // pred_fallthru
          _
        // Predicated region
        $region21: #{tpu_custom_call.1} parent=11 // pred_check
          %p359 = pneg %p115
        $region22: #{tpu_custom_call.1} parent=11 // pred_check_branch
          %361 = sbr.rel (%p359) target = $region24
        $region23: #{tpu_custom_call.1} parent=11 // pred_region
          %s363 = ssub.s32 1152, 1152
          %364 = vsyncadd [#allocation6], %s363
          %s365 = sshll.u32 [#allocation5], 4
          %s366 = int_to_ptr.vmem [resolvable:$true] %s365
          %371 = dma.hbm_to_vmem [thread:$0]  %s3, 1152, %s366, [#allocation6], 384, 384, 24
        $region24: #{tpu_custom_call.1} parent=11 // pred_fallthru
          _
        // Predicated region
        $region25: #{tpu_custom_call.1} parent=11 // pred_check
          %p372 = pneg %p136
        $region26: #{tpu_custom_call.1} parent=11 // pred_check_branch
          %374 = sbr.rel (%p372) target = $region28
        $region27: #{tpu_custom_call.1} parent=11 // pred_region
          _
        $region28: #{tpu_custom_call.1} parent=11 // pred_fallthru
          _
        // Predicated region
        $region29: #{tpu_custom_call.1} parent=11 // pred_check
          %p375 = pneg %p157
        $region30: #{tpu_custom_call.1} parent=11 // pred_check_branch
          %377 = sbr.rel (%p375) target = $region32
        $region31: #{tpu_custom_call.1} parent=11 // pred_region
          %s379 = ssub.s32 3072, 3072
          %380 = vsyncadd [#allocation6], %s379
          %s381 = sshll.u32 [#allocation7], 4
          %s382 = int_to_ptr.vmem [resolvable:$true] %s381
          %387 = dma.hbm_to_vmem [thread:$0]  %s5, 3072, %s382, [#allocation6], 64, 64, 4
        $region32: #{tpu_custom_call.1} parent=11 // pred_fallthru
          _
        // Predicated region
        $region33: #{tpu_custom_call.1} parent=11 // pred_check
          %p388 = pneg %p178
        $region34: #{tpu_custom_call.1} parent=11 // pred_check_branch
          %390 = sbr.rel (%p388) target = $region36
        $region35: #{tpu_custom_call.1} parent=11 // pred_region
          %s392 = ssub.s32 16, 16
          %393 = vsyncadd [#allocation9], %s392
          %s395 = sshll.u32 [#allocation8], 4
          %s396 = int_to_ptr.vmem [resolvable:$true] %s395
          %398 = dma.hbm_to_vmem [thread:$0]  %s6, 16, %s396, [#allocation9]
        $region36: #{tpu_custom_call.1} parent=11 // pred_fallthru
          _
        // Predicated region
        $region37: #{tpu_custom_call.1} parent=11 // pred_check
          %p399 = pneg %p199
        $region38: #{tpu_custom_call.1} parent=11 // pred_check_branch
          %401 = sbr.rel (%p399) target = $region40
        $region39: #{tpu_custom_call.1} parent=11 // pred_region
          _
        $region40: #{tpu_custom_call.1} parent=11 // pred_fallthru
          _
        // Predicated region
        $region41: #{tpu_custom_call.1} parent=11 // pred_check
          %p402 = pneg %p220
        $region42: #{tpu_custom_call.1} parent=11 // pred_check_branch
          %404 = sbr.rel (%p402) target = $region44
        $region43: #{tpu_custom_call.1} parent=11 // pred_region
          _
        $region44: #{tpu_custom_call.1} parent=11 // pred_fallthru
          _
        // Predicated region
        $region45: #{tpu_custom_call.1} parent=11 // pred_check
          %p405 = pneg %p241
        $region46: #{tpu_custom_call.1} parent=11 // pred_check_branch
          %407 = sbr.rel (%p405) target = $region48
        $region47: #{tpu_custom_call.1} parent=11 // pred_region
          %s409 = ssub.s32 1024, 1024
          %410 = vsyncadd [#allocation9], %s409
          %s411 = sshll.u32 [#allocation10], 4
          %s412 = int_to_ptr.vmem [resolvable:$true] %s411
          %417 = dma.hbm_to_vmem [thread:$0]  %s9, 1024, %s412, [#allocation9], 64, 64, 4
        $region48: #{tpu_custom_call.1} parent=11 // pred_fallthru
          _
        // Predicated region
        $region49: #{tpu_custom_call.1} parent=11 // pred_check
          %p418 = pneg %p262
        $region50: #{tpu_custom_call.1} parent=11 // pred_check_branch
          %420 = sbr.rel (%p418) target = $region52
        $region51: #{tpu_custom_call.1} parent=11 // pred_region
          _
        $region52: #{tpu_custom_call.1} parent=11 // pred_fallthru
          _
        // Predicated region
        $region53: #{tpu_custom_call.1} parent=11 // pred_check
          %p421 = pneg %p283
        $region54: #{tpu_custom_call.1} parent=11 // pred_check_branch
          %423 = sbr.rel (%p421) target = $region56
        $region55: #{tpu_custom_call.1} parent=11 // pred_region
          %s425 = ssub.s32 2048, 2048
          %426 = vsyncadd [#allocation12], %s425
          %s427 = sshll.u32 [#allocation11], 4
          %s428 = int_to_ptr.vmem [resolvable:$true] %s427
          %433 = dma.hbm_to_vmem [thread:$0]  %s11, 2048, %s428, [#allocation12], 128, 128, 8
        $region56: #{tpu_custom_call.1} parent=11 // pred_fallthru
          _
        // Predicated region
        $region57: #{tpu_custom_call.1} parent=11 // pred_check
          %p434 = pneg %p304
        $region58: #{tpu_custom_call.1} parent=11 // pred_check_branch
          %436 = sbr.rel (%p434) target = $region60
        $region59: #{tpu_custom_call.1} parent=11 // pred_region
          _
        $region60: #{tpu_custom_call.1} parent=11 // pred_fallthru
          _
      $region12: #{tpu_custom_call.1} parent=5 // pred_fallthru
        _
      %p437 = scmp.lt.s32.totalorder %s26, 2
      // Predicated region
      $region61: #{tpu_custom_call.1} parent=5 // pred_check
        %p438 = pneg %p437
      $region62: #{tpu_custom_call.1} parent=5 // pred_check_branch
        %440 = sbr.rel (%p438) target = $region64
      $region63: #{tpu_custom_call.1} parent=5 // pred_region
        // Predicated region
        $region65: #{tpu_custom_call.1} parent=63 // pred_check
          %p441 = pneg %p46
        $region66: #{tpu_custom_call.1} parent=63 // pred_check_branch
          %443 = sbr.rel (%p441) target = $region68
        $region67: #{tpu_custom_call.1} parent=63 // pred_region
          %p444 = scmp.lt.s32.totalorder %s26, 1
          %s445 = scalar_select %p444, %s26, 1
          %s446 = smul.addr %s445, 2
          %s447 = smul.addr %s446, 8
          %s448 = scalar_lea.vmem %s0, %s447
        $region68: #{tpu_custom_call.1} parent=63 // pred_fallthru
          _
      $region64: #{tpu_custom_call.1} parent=5 // pred_fallthru
        _
      %p449 = scmp.le.s32.totalorder 1, %s26
      %p450 = scmp.lt.s32.totalorder %s26, 3
      %p451 = pnand %p449, %p450
      %p452 = pneg %p451
      // Predicated region
      $region69: #{tpu_custom_call.1} parent=5 // pred_check
        _
      $region70: #{tpu_custom_call.1} parent=5 // pred_check_branch
        %454 = sbr.rel (%p451) target = $region72
      $region71: #{tpu_custom_call.1} parent=5 // pred_region
        %s455 = ssub.s32 %s26, 1
        // Predicated region
        $region73: #{tpu_custom_call.1} parent=71 // pred_check
          %p456 = pneg %p94
        $region74: #{tpu_custom_call.1} parent=71 // pred_check_branch
          %458 = sbr.rel (%p456) target = $region76
        $region75: #{tpu_custom_call.1} parent=71 // pred_region
          %459 = dma.done [#allocation3], 16
        $region76: #{tpu_custom_call.1} parent=71 // pred_fallthru
          _
        // Predicated region
        $region77: #{tpu_custom_call.1} parent=71 // pred_check
          %p460 = pneg %p115
        $region78: #{tpu_custom_call.1} parent=71 // pred_check_branch
          %462 = sbr.rel (%p460) target = $region80
        $region79: #{tpu_custom_call.1} parent=71 // pred_region
          %463 = dma.done [#allocation6], 1152
        $region80: #{tpu_custom_call.1} parent=71 // pred_fallthru
          _
        // Predicated region
        $region81: #{tpu_custom_call.1} parent=71 // pred_check
          %p464 = pneg %p157
        $region82: #{tpu_custom_call.1} parent=71 // pred_check_branch
          %466 = sbr.rel (%p464) target = $region84
        $region83: #{tpu_custom_call.1} parent=71 // pred_region
          %467 = dma.done [#allocation6], 3072
        $region84: #{tpu_custom_call.1} parent=71 // pred_fallthru
          _
        // Predicated region
        $region85: #{tpu_custom_call.1} parent=71 // pred_check
          %p468 = pneg %p178
        $region86: #{tpu_custom_call.1} parent=71 // pred_check_branch
          %470 = sbr.rel (%p468) target = $region88
        $region87: #{tpu_custom_call.1} parent=71 // pred_region
          %471 = dma.done [#allocation9], 16
        $region88: #{tpu_custom_call.1} parent=71 // pred_fallthru
          _
        // Predicated region
        $region89: #{tpu_custom_call.1} parent=71 // pred_check
          %p472 = pneg %p241
        $region90: #{tpu_custom_call.1} parent=71 // pred_check_branch
          %474 = sbr.rel (%p472) target = $region92
        $region91: #{tpu_custom_call.1} parent=71 // pred_region
          %475 = dma.done [#allocation9], 1024
        $region92: #{tpu_custom_call.1} parent=71 // pred_fallthru
          _
        // Predicated region
        $region93: #{tpu_custom_call.1} parent=71 // pred_check
          %p476 = pneg %p283
        $region94: #{tpu_custom_call.1} parent=71 // pred_check_branch
          %478 = sbr.rel (%p476) target = $region96
        $region95: #{tpu_custom_call.1} parent=71 // pred_region
          %479 = dma.done [#allocation12], 2048
        $region96: #{tpu_custom_call.1} parent=71 // pred_fallthru
          _
        %p480 = scmp.lt.s32.totalorder %s31, 1
        %s481 = scalar_select %p480, %s31, 1
        %s482 = smul.addr %s481, 2
        %s483 = smul.addr %s482, 8
        %s484 = scalar_lea.vmem %s0, %s483
        %p485 = pneg %p52
        %p486 = pneg %p49
        %p487 = pneg %p73
        %p488 = pneg %p70
        %p489 = pneg %p94
        %p490 = pneg %p91
        %p491 = pneg %p115
        %p492 = pneg %p112
        %p493 = pneg %p136
        %p494 = pneg %p133
        %p495 = pneg %p157
        %p496 = pneg %p154
        %p497 = pneg %p178
        %p498 = pneg %p175
        %p499 = pneg %p199
        %p500 = pneg %p196
        %p501 = pneg %p220
        %p502 = pneg %p217
        %p503 = pneg %p241
        %p504 = pneg %p238
        %p505 = pneg %p262
        %p506 = pneg %p259
        %p507 = pneg %p283
        %p508 = pneg %p280
        %p509 = pneg %p304
        %p510 = pneg %p301
        %p511 = pneg %p330
        %p512 = pneg %p327
        %s513 = sand.u32 %s317, 1
        %s514 = scalar_lea.sflag [#allocation4], %s513
        %s515 = sand.u32 %s317, 1
        %s516 = smul.addr %s515, 32
        %s517 = scalar_lea.vmem [#allocation13], %s516
        %p518 = scmp.lt.s32.totalorder %s31, 1
        %s519 = scalar_select %p518, %s31, 1
        %s520 = smul.addr %s519, 2
        %s521 = smul.addr %s520, 8
        %s522 = scalar_lea.vmem %s0, %s521
        %v524 = vld [vmem:[%s522] sm:$0xff]
        %v525 = vld [vmem:[%s522 + $0x8] sm:$0xff]
        %vm526 = vcmask 48128
        %v527 = vsel %vm526, %v524, 0.0
        %528 = vadd.xlane.f32.xlu0 %v527
        %v529 = vpop.xlane.xlu0 %528
        %v530 = vsel %vm526, %v525, 0.0
        %531 = vadd.xlane.f32.xlu0 %v530
        %v532 = vpop.xlane.xlu0 %531
        %v533 = vrcp.pop 6.0
        %v534 = vmul.f32 %v529, %v533
        %v535 = vmul.f32 %v532, %v533
        %v536 = vsub.f32 %v524, %v534
        %v537 = vsub.f32 %v525, %v535
        %v538 = vmul.f32 %v536, %v536
        %v539 = vmul.f32 %v537, %v537
        %v540 = vsel %vm526, %v538, 0.0
        %541 = vadd.xlane.f32.xlu0 %v540
        %v542 = vpop.xlane.xlu0 %541
        %v543 = vsel %vm526, %v539, 0.0
        %544 = vadd.xlane.f32.xlu0 %v543
        %v545 = vpop.xlane.xlu0 %544
        %v546 = vmul.f32 %v542, %v533
        %v547 = vmul.f32 %v545, %v533
        %v548 = vadd.f32 %v546, 1e-05
        %v549 = vadd.f32 %v547, 1e-05
        %v550 = vrsqrt.pop %v548
        %v551 = vrsqrt.pop %v549
        %v552 = vmul.f32 %v536, %v550
        %v553 = vmul.f32 %v537, %v551
        %v554 = vld [vmem:[%s1] sm:$0x1]
        %v556 = vlaneseq
        %v557 = vshrl.u32 %v556, 7
        %v558 = vsub.s32 0, %v557
        %v559 = vrot.slane %v554, %v558
        %v561 = vmul.f32 %v552, %v559
        %v562 = vmul.f32 %v553, %v559
        %v563 = vld [vmem:[#allocation2] sm:$0x1]
        %v565 = vlaneseq
        %v566 = vshrl.u32 %v565, 7
        %v567 = vsub.s32 0, %v566
        %v568 = vrot.slane %v563, %v567
        %v570 = vadd.f32 %v561, %v568
        %v571 = vadd.f32 %v562, %v568
        %v572 = vlaneseq
        %v573 = vshrl.u32 %v572, 7
        %v574 = vadd.s32 %v573, 8
        %vm575 = vcmp.lt.s32.totalorder %v573, 0
        %v576 = vsub.s32 0, %v573
        %v577 = vsel %vm575, %v576, %v573
        %v578 = vshrl.u32 %v577, 4
        %v579 = vand.u32 %v577, 15
        %v580 = vsub.s32 0, %v579
        %v581 = vsel %vm575, %v580, %v579
        %vm582 = vcmp.lt.s32.totalorder %v574, 0
        %v583 = vsub.s32 0, %v574
        %v584 = vsel %vm582, %v583, %v574
        %v585 = vshrl.u32 %v584, 4
        %v586 = vand.u32 %v584, 15
        %v587 = vsub.s32 0, %v586
        %v588 = vsel %vm582, %v587, %v586
        %vm589 = vcmp.ne.s32.totalorder %v581, 0
        %vm590 = vcmp.ne.s32.totalorder %v588, 0
        %vm591 = vcmp.lt.s32.totalorder %v581, 0
        %vm592 = vcmp.lt.s32.totalorder %v588, 0
        %vm593 = vmand %vm591, %vm589
        %vm594 = vmand %vm592, %vm590
        %v595 = vadd.s32 %v581, 16
        %v596 = vadd.s32 %v588, 16
        %v597 = vsel %vm593, %v595, %v581
        %v598 = vsel %vm594, %v596, %v588
        %vm599 = vcmp.eq.s32.totalorder %v597, 0
        %vm600 = vcmp.eq.s32.totalorder %v598, 0
        %vm601 = vcmp.eq.s32.totalorder %v597, 15
        %vm602 = vcmp.eq.s32.totalorder %v598, 15
        %v603 = vrot.slane %v570, 7
        %v604 = vrot.slane %v571, 7
        %vm605 = vcmp.lt.s32.totalorder %v573, 1
        %v606 = vsel %vm605, %v603, %v604
        %v607 = vsel %vm605, %v604, %v603
        %v608 = vsel %vm599, 1, 0
        %v609 = vsel %vm600, 1, 0
        %vm610 = vcmp.eq.s32.totalorder %v608, 1
        %vm611 = vcmp.eq.s32.totalorder %v609, 1
        %v612 = vsel %vm610, 0.0, %v607
        %v613 = vsel %vm611, 0.0, %v606
        %v614 = vrot.slane %v570, 1
        %v615 = vrot.slane %v571, 1
        %vm616 = vcmp.lt.s32.totalorder %v573, 7
        %v617 = vsel %vm616, %v614, %v615
        %v618 = vsel %vm616, %v615, %v614
        %v619 = vsel %vm601, 1, 0
        %v620 = vsel %vm602, 1, 0
        %vm621 = vcmp.eq.s32.totalorder %v619, 1
        %vm622 = vcmp.eq.s32.totalorder %v620, 1
        %v623 = vsel %vm621, 0.0, %v617
        %v624 = vsel %vm622, 0.0, %v618
        %627 = vrot.lane.b32.xlu0 %v570, 6
        %v628 = vpop.permute.xlu0 %627
        %629 = vrot.lane.b32.xlu0 %v571, 6
        %v630 = vpop.permute.xlu0 %629
        %635 = vrot.lane.b32.xlu0 %v623, 12
        %v636 = vpop.permute.xlu0 %635
        %637 = vrot.lane.b32.xlu0 %v624, 12
        %v638 = vpop.permute.xlu0 %637
        %v641 = vsel %vm526, %v612, %v628
        %v642 = vsel %vm526, %v613, %v630
        %vm643 = vcmask 97280
        %v644 = vsel %vm643, %v641, %v636
        %v645 = vsel %vm643, %v642, %v638
        %v646 = vld [vmem:[#allocation5] sm:$0xff]
        %v647 = vld [vmem:[#allocation5 + $0x8] sm:$0xff]
        %v648 = vld [vmem:[#allocation5 + $0x10] sm:$0xff]
        %v649 = vld [vmem:[#allocation5 + $0x18] sm:$0xff]
        %v650 = vld [vmem:[#allocation5 + $0x20] sm:$0xff]
        %v651 = vld [vmem:[#allocation5 + $0x28] sm:$0xff]
        %v652 = vld [vmem:[#allocation5 + $0x30] sm:$0x3]
        %v653 = vld [vmem:[#allocation5 + $0x38] sm:$0x3]
        %v654 = vld [vmem:[#allocation5 + $0x40] sm:$0x3]
        %v655 = vld [vmem:[%s4] sm:$0x7]
        %v657 = vlaneseq
        %v658 = vshrl.u32 %v657, 7
        %v659 = vsub.s32 0, %v658
        %v660 = vrot.slane %v655, %v659
        %v661 = vlaneseq
        %v662 = vshrl.u32 %v661, 7
        %v663 = vsub.s32 1, %v662
        %v664 = vrot.slane %v655, %v663
        %v665 = vlaneseq
        %v666 = vshrl.u32 %v665, 7
        %v667 = vsub.s32 2, %v666
        %v668 = vrot.slane %v655, %v667
        %vm672 = vcmask 146432
        %v674 = vsel %vm672, %v644, 0
        %v677 = vsel %vm672, %v645, 0
        %vm679 = vcmask 1041408
        %v681 = vsel %vm679, %v652, 0
        %v684 = vsel %vm679, %v653, 0
        %v687 = vsel %vm679, %v654, 0
        %689 = vmatprep.subr.mxu0 %v647
        %690 = vmatpush1.msra.mxu0 %v646
        %691 = vmatprep.subr.mxu0 %v650
        %692 = vmatpush1.msra.mxu0 %v649
        %693 = vmatprep.subr.mxu0 %v684
        %694 = vmatpush1.msra.mxu0 %v681
        %695 = vmatprep.subr.mxu0 0.0
        %696 = vmatpush1.msra.mxu0 0.0
        %697 = vmatprep.subr.mxu0 0.0
        %698 = vmatpush1.msra.mxu0 0.0
        %699 = vmatprep.subr.mxu0 0.0
        %700 = vmatpush1.msra.mxu0 0.0
        %701 = vmatprep.subr.mxu0 0.0
        %702 = vmatpush1.msra.mxu0 0.0
        %703 = vmatprep.subr.mxu0 0.0
        %704 = vmatpush1.msra.mxu0 0.0
        %705 = vmatprep.subr.mxu0 0.0
        %706 = vmatpush1.msra.mxu0 0.0
        %707 = vmatprep.subr.mxu0 0.0
        %708 = vmatpush1.msra.mxu0 0.0
        %709 = vmatprep.subr.mxu0 0.0
        %710 = vmatpush1.msra.mxu0 0.0
        %711 = vmatprep.subr.mxu0 0.0
        %712 = vmatpush1.msra.mxu0 0.0
        %713 = vmatprep.subr.mxu0 0.0
        %714 = vmatpush1.msra.mxu0 0.0
        %715 = vmatprep.subr.mxu0 0.0
        %716 = vmatpush1.msra.mxu0 0.0
        %717 = vmatprep.subr.mxu0 0.0
        %718 = vmatpush1.msra.mxu0 0.0
        %719 = vmatprep.subr.mxu0 0.0
        %720 = vmatpush1.msra.mxu0 0.0
        %721 = vmatprep.subr.mxu0 0.0
        %722 = vmatpush1.msra.mxu0 0.0
        %723 = vmatprep.subr.mxu0 0.0
        %724 = vmatpush1.msra.mxu0 0.0
        %725 = vmatprep.subr.mxu0 0.0
        %726 = vmatpush1.msra.mxu0 0.0
        %727 = vmatprep.subr.mxu0 0.0
        %728 = vmatpush1.msra.mxu0 0.0
        %729 = vmatprep.subr.mxu0 0.0
        %730 = vmatpush1.msra.mxu0 0.0
        %731 = vmatprep.subr.mxu0 0.0
        %732 = vmatpush1.msra.mxu0 0.0
        %733 = vmatprep.subr.mxu0 0.0
        %734 = vmatpush1.msra.mxu0 0.0
        %735 = vmatprep.subr.mxu0 0.0
        %736 = vmatpush1.msra.mxu0 0.0
        %737 = vmatprep.subr.mxu0 0.0
        %738 = vmatpush1.msra.mxu0 0.0
        %739 = vmatprep.subr.mxu0 0.0
        %740 = vmatpush1.msra.mxu0 0.0
        %741 = vmatprep.subr.mxu0 0.0
        %742 = vmatpush1.msra.mxu0 0.0
        %743 = vmatprep.subr.mxu0 0.0
        %744 = vmatpush1.msra.mxu0 0.0
        %745 = vmatprep.subr.mxu0 0.0
        %746 = vmatpush1.msra.mxu0 0.0
        %747 = vmatprep.subr.mxu0 0.0
        %748 = vmatpush1.msra.mxu0 0.0
        %749 = vmatprep.subr.mxu0 0.0
        %750 = vmatpush1.msra.mxu0 0.0
        %751 = vmatprep.subr.mxu0 0.0
        %752 = vmatpush1.msra.mxu0 0.0
        %753 = vmatprep.mubr.f32.mxu0 0.0
        %754 = vmatmul.mubr.f32.gmra.mrb[0].mxu0 %v674
        %v755 = vpop.f32.mrb[0].mxu0
        %v756 = vadd.f32 %v660, %v755
        %v757 = vpop.f32.mrb[0].mxu0
        %v758 = vadd.f32 %v664, %v757
        %759 = vmatprep.mubr.f32.mxu0 0.0
        %760 = vmatmul.mubr.f32.gmra.mrb[0].mxu0 %v677
        %v761 = vpop.f32.mrb[0].mxu0
        %v762 = vadd.f32 %v660, %v761
        %v763 = vpop.f32.mrb[0].mxu0
        %v764 = vadd.f32 %v664, %v763
        %765 = vdwg.mxu0
        %766 = vmatprep.subr.mxu0 0.0
        %767 = vmatpush1.msra.mxu0 %v648
        %768 = vmatprep.subr.mxu0 0.0
        %769 = vmatpush1.msra.mxu0 %v651
        %770 = vmatprep.subr.mxu0 0.0
        %771 = vmatpush1.msra.mxu0 %v687
        %772 = vmatprep.subr.mxu0 0.0
        %773 = vmatpush1.msra.mxu0 0.0
        %774 = vmatprep.subr.mxu0 0.0
        %775 = vmatpush1.msra.mxu0 0.0
        %776 = vmatprep.subr.mxu0 0.0
        %777 = vmatpush1.msra.mxu0 0.0
        %778 = vmatprep.subr.mxu0 0.0
        %779 = vmatpush1.msra.mxu0 0.0
        %780 = vmatprep.subr.mxu0 0.0
        %781 = vmatpush1.msra.mxu0 0.0
        %782 = vmatprep.subr.mxu0 0.0
        %783 = vmatpush1.msra.mxu0 0.0
        %784 = vmatprep.subr.mxu0 0.0
        %785 = vmatpush1.msra.mxu0 0.0
        %786 = vmatprep.subr.mxu0 0.0
        %787 = vmatpush1.msra.mxu0 0.0
        %788 = vmatprep.subr.mxu0 0.0
        %789 = vmatpush1.msra.mxu0 0.0
        %790 = vmatprep.subr.mxu0 0.0
        %791 = vmatpush1.msra.mxu0 0.0
        %792 = vmatprep.subr.mxu0 0.0
        %793 = vmatpush1.msra.mxu0 0.0
        %794 = vmatprep.subr.mxu0 0.0
        %795 = vmatpush1.msra.mxu0 0.0
        %796 = vmatprep.subr.mxu0 0.0
        %797 = vmatpush1.msra.mxu0 0.0
        %798 = vmatprep.subr.mxu0 0.0
        %799 = vmatpush1.msra.mxu0 0.0
        %800 = vmatprep.subr.mxu0 0.0
        %801 = vmatpush1.msra.mxu0 0.0
        %802 = vmatprep.subr.mxu0 0.0
        %803 = vmatpush1.msra.mxu0 0.0
        %804 = vmatprep.subr.mxu0 0.0
        %805 = vmatpush1.msra.mxu0 0.0
        %806 = vmatprep.subr.mxu0 0.0
        %807 = vmatpush1.msra.mxu0 0.0
        %808 = vmatprep.subr.mxu0 0.0
        %809 = vmatpush1.msra.mxu0 0.0
        %810 = vmatprep.subr.mxu0 0.0
        %811 = vmatpush1.msra.mxu0 0.0
        %812 = vmatprep.subr.mxu0 0.0
        %813 = vmatpush1.msra.mxu0 0.0
        %814 = vmatprep.subr.mxu0 0.0
        %815 = vmatpush1.msra.mxu0 0.0
        %816 = vmatprep.subr.mxu0 0.0
        %817 = vmatpush1.msra.mxu0 0.0
        %818 = vmatprep.subr.mxu0 0.0
        %819 = vmatpush1.msra.mxu0 0.0
        %820 = vmatprep.subr.mxu0 0.0
        %821 = vmatpush1.msra.mxu0 0.0
        %822 = vmatprep.subr.mxu0 0.0
        %823 = vmatpush1.msra.mxu0 0.0
        %824 = vmatprep.subr.mxu0 0.0
        %825 = vmatpush1.msra.mxu0 0.0
        %826 = vmatprep.subr.mxu0 0.0
        %827 = vmatpush1.msra.mxu0 0.0
        %828 = vmatprep.subr.mxu0 0.0
        %829 = vmatpush1.msra.mxu0 0.0
        %830 = vmatprep.mubr.f32.mxu0 0.0
        %831 = vmatmul.mubr.f32.gmra.mrb[0].mxu0 %v674
        %v832 = vpop.f32.mrb[0].mxu0
        %v833 = vadd.f32 %v668, %v832
        %v834 = vpop.f32.mrb[0].mxu0
        %835 = vmatprep.mubr.f32.mxu0 0.0
        %836 = vmatmul.mubr.f32.gmra.mrb[0].mxu0 %v677
        %v837 = vpop.f32.mrb[0].mxu0
        %v838 = vadd.f32 %v668, %v837
        %v839 = vpop.f32.mrb[0].mxu0
        %840 = vdwg.mxu0
        %v841 = vmax.f32 %v756, 0.0
        %v842 = vmax.f32 %v762, 0.0
        %v843 = vrot.slane %v841, 7
        %v844 = vrot.slane %v842, 7
        %v845 = vsel %vm605, %v843, %v844
        %v846 = vsel %vm605, %v844, %v843
        %v847 = vsel %vm610, 0.0, %v846
        %v848 = vsel %vm611, 0.0, %v845
        %v849 = vpack.c.bf16 %v848, %v847
        %v850 = vld [vmem:[#allocation7] sm:$0xf]
        %v851 = vld [vmem:[#allocation7 + $0x4] sm:$0xf]
        %v852 = vld [vmem:[#allocation7 + $0x8] sm:$0xf]
        %v853 = vld [vmem:[#allocation7 + $0xc] sm:$0xf]
        %v854 = vld [vmem:[#allocation7 + $0x10] sm:$0xf]
        %v855 = vld [vmem:[#allocation7 + $0x14] sm:$0xf]
        %v856 = vld [vmem:[#allocation7 + $0x18] sm:$0xf]
        %v857 = vld [vmem:[#allocation7 + $0x1c] sm:$0xf]
        %v858 = vld [vmem:[#allocation7 + $0x20] sm:$0xf]
        %v859 = vld [vmem:[#allocation7 + $0x24] sm:$0xf]
        %v860 = vld [vmem:[#allocation7 + $0x28] sm:$0xf]
        %v861 = vld [vmem:[#allocation7 + $0x2c] sm:$0xf]
        %v862 = vld [vmem:[#allocation7 + $0x30] sm:$0xf]
        %v863 = vld [vmem:[#allocation7 + $0x34] sm:$0xf]
        %v864 = vld [vmem:[#allocation7 + $0x38] sm:$0xf]
        %v865 = vld [vmem:[#allocation7 + $0x3c] sm:$0xf]
        %v866 = vpack.c.bf16 %v842, %v841
        %s867 = scalar_lea.vmem [#allocation7], 64
        %v868 = vld [vmem:[%s867] sm:$0xf]
        %v869 = vld [vmem:[%s867 + $0x4] sm:$0xf]
        %v870 = vld [vmem:[%s867 + $0x8] sm:$0xf]
        %v871 = vld [vmem:[%s867 + $0xc] sm:$0xf]
        %v872 = vld [vmem:[%s867 + $0x10] sm:$0xf]
        %v873 = vld [vmem:[%s867 + $0x14] sm:$0xf]
        %v874 = vld [vmem:[%s867 + $0x18] sm:$0xf]
        %v875 = vld [vmem:[%s867 + $0x1c] sm:$0xf]
        %v876 = vld [vmem:[%s867 + $0x20] sm:$0xf]
        %v877 = vld [vmem:[%s867 + $0x24] sm:$0xf]
        %v878 = vld [vmem:[%s867 + $0x28] sm:$0xf]
        %v879 = vld [vmem:[%s867 + $0x2c] sm:$0xf]
        %v880 = vld [vmem:[%s867 + $0x30] sm:$0xf]
        %v881 = vld [vmem:[%s867 + $0x34] sm:$0xf]
        %v882 = vld [vmem:[%s867 + $0x38] sm:$0xf]
        %v883 = vld [vmem:[%s867 + $0x3c] sm:$0xf]
        %v900 = vunpack.c.l.b16 %v868
        %v901 = vunpack.c.l.b16 %v869
        %v902 = vunpack.c.l.b16 %v870
        %v903 = vunpack.c.l.b16 %v871
        %v904 = vunpack.c.l.b16 %v872
        %v905 = vunpack.c.l.b16 %v873
        %v906 = vunpack.c.l.b16 %v874
        %v907 = vunpack.c.l.b16 %v875
        %v908 = vunpack.c.l.b16 %v876
        %v909 = vunpack.c.l.b16 %v877
        %v910 = vunpack.c.l.b16 %v878
        %v911 = vunpack.c.l.b16 %v879
        %v912 = vunpack.c.l.b16 %v880
        %v913 = vunpack.c.l.b16 %v881
        %v914 = vunpack.c.l.b16 %v882
        %v915 = vunpack.c.l.b16 %v883
        %v916 = vpack.c.b16 %v901, %v900
        %v917 = vpack.c.b16 %v903, %v902
        %v918 = vpack.c.b16 %v905, %v904
        %v919 = vpack.c.b16 %v907, %v906
        %v920 = vpack.c.b16 %v909, %v908
        %v921 = vpack.c.b16 %v911, %v910
        %v922 = vpack.c.b16 %v913, %v912
        %v923 = vpack.c.b16 %v915, %v914
        %932 = vmatprep.subr.bf16.mxu0 0
        %933 = vmatpush1.bf16.msra.mxu0 %v916
        %934 = vmatprep.subr.bf16.mxu0 0
        %935 = vmatpush1.bf16.msra.mxu0 %v917
        %936 = vmatprep.subr.bf16.mxu0 0
        %937 = vmatpush1.bf16.msra.mxu0 %v918
        %938 = vmatprep.subr.bf16.mxu0 0
        %939 = vmatpush1.bf16.msra.mxu0 %v919
        %940 = vmatprep.subr.bf16.mxu0 0
        %941 = vmatpush1.bf16.msra.mxu0 %v920
        %942 = vmatprep.subr.bf16.mxu0 0
        %943 = vmatpush1.bf16.msra.mxu0 %v921
        %944 = vmatprep.subr.bf16.mxu0 0
        %945 = vmatpush1.bf16.msra.mxu0 %v922
        %946 = vmatprep.subr.bf16.mxu0 0
        %947 = vmatpush1.bf16.msra.mxu0 %v923
        %948 = vmatprep.subr.bf16.mxu0 0
        %949 = vmatpush1.bf16.msra.mxu0 0
        %950 = vmatprep.subr.bf16.mxu0 0
        %951 = vmatpush1.bf16.msra.mxu0 0
        %952 = vmatprep.subr.bf16.mxu0 0
        %953 = vmatpush1.bf16.msra.mxu0 0
        %954 = vmatprep.subr.bf16.mxu0 0
        %955 = vmatpush1.bf16.msra.mxu0 0
        %956 = vmatprep.subr.bf16.mxu0 0
        %957 = vmatpush1.bf16.msra.mxu0 0
        %958 = vmatprep.subr.bf16.mxu0 0
        %959 = vmatpush1.bf16.msra.mxu0 0
        %960 = vmatprep.subr.bf16.mxu0 0
        %961 = vmatpush1.bf16.msra.mxu0 0
        %962 = vmatprep.subr.bf16.mxu0 0
        %963 = vmatpush1.bf16.msra.mxu0 0
        %964 = vmatprep.mubr.bf16.mxu0 0
        %965 = vmatmul.mubr.bf16.gmra.mrb[0].mxu0 %v866
        %v966 = vpop.f32.mrb[0].mxu0
        %v967 = vadd.f32 0.0, %v966
        %v968 = vpop.f32.mrb[0].mxu0
        %v969 = vpop.f32.mrb[0].mxu0
        %v970 = vadd.f32 0.0, %v969
        %v971 = vpop.f32.mrb[0].mxu0
        %972 = vdwg.mxu0
        %v989 = vunpack.c.l.b16 %v850
        %v990 = vunpack.c.l.b16 %v851
        %v991 = vunpack.c.l.b16 %v852
        %v992 = vunpack.c.l.b16 %v853
        %v993 = vunpack.c.l.b16 %v854
        %v994 = vunpack.c.l.b16 %v855
        %v995 = vunpack.c.l.b16 %v856
        %v996 = vunpack.c.l.b16 %v857
        %v997 = vunpack.c.l.b16 %v858
        %v998 = vunpack.c.l.b16 %v859
        %v999 = vunpack.c.l.b16 %v860
        %v1000 = vunpack.c.l.b16 %v861
        %v1001 = vunpack.c.l.b16 %v862
        %v1002 = vunpack.c.l.b16 %v863
        %v1003 = vunpack.c.l.b16 %v864
        %v1004 = vunpack.c.l.b16 %v865
        %v1005 = vpack.c.b16 %v990, %v989
        %v1006 = vpack.c.b16 %v992, %v991
        %v1007 = vpack.c.b16 %v994, %v993
        %v1008 = vpack.c.b16 %v996, %v995
        %v1009 = vpack.c.b16 %v998, %v997
        %v1010 = vpack.c.b16 %v1000, %v999
        %v1011 = vpack.c.b16 %v1002, %v1001
        %v1012 = vpack.c.b16 %v1004, %v1003
        %1021 = vmatprep.subr.bf16.mxu0 0
        %1022 = vmatpush1.bf16.msra.mxu0 %v1005
        %1023 = vmatprep.subr.bf16.mxu0 0
        %1024 = vmatpush1.bf16.msra.mxu0 %v1006
        %1025 = vmatprep.subr.bf16.mxu0 0
        %1026 = vmatpush1.bf16.msra.mxu0 %v1007
        %1027 = vmatprep.subr.bf16.mxu0 0
        %1028 = vmatpush1.bf16.msra.mxu0 %v1008
        %1029 = vmatprep.subr.bf16.mxu0 0
        %1030 = vmatpush1.bf16.msra.mxu0 %v1009
        %1031 = vmatprep.subr.bf16.mxu0 0
        %1032 = vmatpush1.bf16.msra.mxu0 %v1010
        %1033 = vmatprep.subr.bf16.mxu0 0
        %1034 = vmatpush1.bf16.msra.mxu0 %v1011
        %1035 = vmatprep.subr.bf16.mxu0 0
        %1036 = vmatpush1.bf16.msra.mxu0 %v1012
        %1037 = vmatprep.subr.bf16.mxu0 0
        %1038 = vmatpush1.bf16.msra.mxu0 0
        %1039 = vmatprep.subr.bf16.mxu0 0
        %1040 = vmatpush1.bf16.msra.mxu0 0
        %1041 = vmatprep.subr.bf16.mxu0 0
        %1042 = vmatpush1.bf16.msra.mxu0 0
        %1043 = vmatprep.subr.bf16.mxu0 0
        %1044 = vmatpush1.bf16.msra.mxu0 0
        %1045 = vmatprep.subr.bf16.mxu0 0
        %1046 = vmatpush1.bf16.msra.mxu0 0
        %1047 = vmatprep.subr.bf16.mxu0 0
        %1048 = vmatpush1.bf16.msra.mxu0 0
        %1049 = vmatprep.subr.bf16.mxu0 0
        %1050 = vmatpush1.bf16.msra.mxu0 0
        %1051 = vmatprep.subr.bf16.mxu0 0
        %1052 = vmatpush1.bf16.msra.mxu0 0
        %1053 = vmatprep.mubr.bf16.mxu0 0
        %1054 = vmatmul.mubr.bf16.gmra.mrb[0].mxu0 %v849
        %v1055 = vpop.f32.mrb[0].mxu0
        %v1056 = vadd.f32 %v967, %v1055
        %v1057 = vpop.f32.mrb[0].mxu0
        %v1058 = vpop.f32.mrb[0].mxu0
        %v1059 = vadd.f32 %v970, %v1058
        %v1060 = vpop.f32.mrb[0].mxu0
        %1061 = vdwg.mxu0
        %v1062 = vrot.slane %v841, 1
        %v1063 = vrot.slane %v842, 1
        %v1064 = vsel %vm616, %v1062, %v1063
        %v1065 = vsel %vm616, %v1063, %v1062
        %v1066 = vsel %vm621, 0.0, %v1064
        %v1067 = vsel %vm622, 0.0, %v1065
        %v1068 = vpack.c.bf16 %v1067, %v1066
        %s1069 = scalar_lea.vmem [#allocation7], 128
        %v1070 = vld [vmem:[%s1069] sm:$0xf]
        %v1071 = vld [vmem:[%s1069 + $0x4] sm:$0xf]
        %v1072 = vld [vmem:[%s1069 + $0x8] sm:$0xf]
        %v1073 = vld [vmem:[%s1069 + $0xc] sm:$0xf]
        %v1074 = vld [vmem:[%s1069 + $0x10] sm:$0xf]
        %v1075 = vld [vmem:[%s1069 + $0x14] sm:$0xf]
        %v1076 = vld [vmem:[%s1069 + $0x18] sm:$0xf]
        %v1077 = vld [vmem:[%s1069 + $0x1c] sm:$0xf]
        %v1078 = vld [vmem:[%s1069 + $0x20] sm:$0xf]
        %v1079 = vld [vmem:[%s1069 + $0x24] sm:$0xf]
        %v1080 = vld [vmem:[%s1069 + $0x28] sm:$0xf]
        %v1081 = vld [vmem:[%s1069 + $0x2c] sm:$0xf]
        %v1082 = vld [vmem:[%s1069 + $0x30] sm:$0xf]
        %v1083 = vld [vmem:[%s1069 + $0x34] sm:$0xf]
        %v1084 = vld [vmem:[%s1069 + $0x38] sm:$0xf]
        %v1085 = vld [vmem:[%s1069 + $0x3c] sm:$0xf]
        %v1102 = vunpack.c.l.b16 %v1070
        %v1103 = vunpack.c.l.b16 %v1071
        %v1104 = vunpack.c.l.b16 %v1072
        %v1105 = vunpack.c.l.b16 %v1073
        %v1106 = vunpack.c.l.b16 %v1074
        %v1107 = vunpack.c.l.b16 %v1075
        %v1108 = vunpack.c.l.b16 %v1076
        %v1109 = vunpack.c.l.b16 %v1077
        %v1110 = vunpack.c.l.b16 %v1078
        %v1111 = vunpack.c.l.b16 %v1079
        %v1112 = vunpack.c.l.b16 %v1080
        %v1113 = vunpack.c.l.b16 %v1081
        %v1114 = vunpack.c.l.b16 %v1082
        %v1115 = vunpack.c.l.b16 %v1083
        %v1116 = vunpack.c.l.b16 %v1084
        %v1117 = vunpack.c.l.b16 %v1085
        %v1118 = vpack.c.b16 %v1103, %v1102
        %v1119 = vpack.c.b16 %v1105, %v1104
        %v1120 = vpack.c.b16 %v1107, %v1106
        %v1121 = vpack.c.b16 %v1109, %v1108
        %v1122 = vpack.c.b16 %v1111, %v1110
        %v1123 = vpack.c.b16 %v1113, %v1112
        %v1124 = vpack.c.b16 %v1115, %v1114
        %v1125 = vpack.c.b16 %v1117, %v1116
        %1134 = vmatprep.subr.bf16.mxu0 0
        %1135 = vmatpush1.bf16.msra.mxu0 %v1118
        %1136 = vmatprep.subr.bf16.mxu0 0
        %1137 = vmatpush1.bf16.msra.mxu0 %v1119
        %1138 = vmatprep.subr.bf16.mxu0 0
        %1139 = vmatpush1.bf16.msra.mxu0 %v1120
        %1140 = vmatprep.subr.bf16.mxu0 0
        %1141 = vmatpush1.bf16.msra.mxu0 %v1121
        %1142 = vmatprep.subr.bf16.mxu0 0
        %1143 = vmatpush1.bf16.msra.mxu0 %v1122
        %1144 = vmatprep.subr.bf16.mxu0 0
        %1145 = vmatpush1.bf16.msra.mxu0 %v1123
        %1146 = vmatprep.subr.bf16.mxu0 0
        %1147 = vmatpush1.bf16.msra.mxu0 %v1124
        %1148 = vmatprep.subr.bf16.mxu0 0
        %1149 = vmatpush1.bf16.msra.mxu0 %v1125
        %1150 = vmatprep.subr.bf16.mxu0 0
        %1151 = vmatpush1.bf16.msra.mxu0 0
        %1152 = vmatprep.subr.bf16.mxu0 0
        %1153 = vmatpush1.bf16.msra.mxu0 0
        %1154 = vmatprep.subr.bf16.mxu0 0
        %1155 = vmatpush1.bf16.msra.mxu0 0
        %1156 = vmatprep.subr.bf16.mxu0 0
        %1157 = vmatpush1.bf16.msra.mxu0 0
        %1158 = vmatprep.subr.bf16.mxu0 0
        %1159 = vmatpush1.bf16.msra.mxu0 0
        %1160 = vmatprep.subr.bf16.mxu0 0
        %1161 = vmatpush1.bf16.msra.mxu0 0
        %1162 = vmatprep.subr.bf16.mxu0 0
        %1163 = vmatpush1.bf16.msra.mxu0 0
        %1164 = vmatprep.subr.bf16.mxu0 0
        %1165 = vmatpush1.bf16.msra.mxu0 0
        %1166 = vmatprep.mubr.bf16.mxu0 0
        %1167 = vmatmul.mubr.bf16.gmra.mrb[0].mxu0 %v1068
        %v1168 = vpop.f32.mrb[0].mxu0
        %v1169 = vadd.f32 0.0, %v1168
        %v1170 = vpop.f32.mrb[0].mxu0
        %v1171 = vpop.f32.mrb[0].mxu0
        %v1172 = vadd.f32 0.0, %v1171
        %v1173 = vpop.f32.mrb[0].mxu0
        %1174 = vdwg.mxu0
        %v1175 = vadd.f32 %v1056, %v1169
        %v1176 = vadd.f32 %v1059, %v1172
        %v1177 = vld [vmem:[#allocation8] sm:$0x1]
        %v1179 = vlaneseq
        %v1180 = vshrl.u32 %v1179, 7
        %v1181 = vsub.s32 0, %v1180
        %v1182 = vrot.slane %v1177, %v1181
        %v1184 = vadd.f32 %v1175, %v1182
        %v1185 = vadd.f32 %v1176, %v1182
        %v1186 = vmax.f32 %v1184, 0.0
        %v1187 = vmax.f32 %v1185, 0.0
        %v1188 = vpack.c.bf16 %v1187, %v1186
        %v1189 = vld [vmem:[%s7] sm:$0xf]
        %v1190 = vld [vmem:[%s7 + $0x4] sm:$0xf]
        %v1191 = vld [vmem:[%s7 + $0x8] sm:$0xf]
        %v1192 = vld [vmem:[%s7 + $0xc] sm:$0xf]
        %v1193 = vld [vmem:[%s7 + $0x10] sm:$0xf]
        %v1194 = vld [vmem:[%s7 + $0x14] sm:$0xf]
        %v1195 = vld [vmem:[%s7 + $0x18] sm:$0xf]
        %v1196 = vld [vmem:[%s7 + $0x1c] sm:$0xf]
        %v1197 = vld [vmem:[%s7 + $0x20] sm:$0xf]
        %v1198 = vld [vmem:[%s7 + $0x24] sm:$0xf]
        %v1199 = vld [vmem:[%s7 + $0x28] sm:$0xf]
        %v1200 = vld [vmem:[%s7 + $0x2c] sm:$0xf]
        %v1201 = vld [vmem:[%s7 + $0x30] sm:$0xf]
        %v1202 = vld [vmem:[%s7 + $0x34] sm:$0xf]
        %v1203 = vld [vmem:[%s7 + $0x38] sm:$0xf]
        %v1204 = vld [vmem:[%s7 + $0x3c] sm:$0xf]
        %v1205 = vld [vmem:[%s8] sm:$0x1]
        %v1207 = vlaneseq
        %v1208 = vshrl.u32 %v1207, 7
        %v1209 = vsub.s32 0, %v1208
        %v1210 = vrot.slane %v1205, %v1209
        %v1228 = vunpack.c.l.b16 %v1189
        %v1229 = vunpack.c.l.b16 %v1190
        %v1230 = vunpack.c.l.b16 %v1191
        %v1231 = vunpack.c.l.b16 %v1192
        %v1232 = vunpack.c.l.b16 %v1193
        %v1233 = vunpack.c.l.b16 %v1194
        %v1234 = vunpack.c.l.b16 %v1195
        %v1235 = vunpack.c.l.b16 %v1196
        %v1236 = vunpack.c.l.b16 %v1197
        %v1237 = vunpack.c.l.b16 %v1198
        %v1238 = vunpack.c.l.b16 %v1199
        %v1239 = vunpack.c.l.b16 %v1200
        %v1240 = vunpack.c.l.b16 %v1201
        %v1241 = vunpack.c.l.b16 %v1202
        %v1242 = vunpack.c.l.b16 %v1203
        %v1243 = vunpack.c.l.b16 %v1204
        %v1244 = vpack.c.b16 %v1229, %v1228
        %v1245 = vpack.c.b16 %v1231, %v1230
        %v1246 = vpack.c.b16 %v1233, %v1232
        %v1247 = vpack.c.b16 %v1235, %v1234
        %v1248 = vpack.c.b16 %v1237, %v1236
        %v1249 = vpack.c.b16 %v1239, %v1238
        %v1250 = vpack.c.b16 %v1241, %v1240
        %v1251 = vpack.c.b16 %v1243, %v1242
        %1260 = vmatprep.subr.bf16.mxu0 0
        %1261 = vmatpush1.bf16.msra.mxu0 %v1244
        %1262 = vmatprep.subr.bf16.mxu0 0
        %1263 = vmatpush1.bf16.msra.mxu0 %v1245
        %1264 = vmatprep.subr.bf16.mxu0 0
        %1265 = vmatpush1.bf16.msra.mxu0 %v1246
        %1266 = vmatprep.subr.bf16.mxu0 0
        %1267 = vmatpush1.bf16.msra.mxu0 %v1247
        %1268 = vmatprep.subr.bf16.mxu0 0
        %1269 = vmatpush1.bf16.msra.mxu0 %v1248
        %1270 = vmatprep.subr.bf16.mxu0 0
        %1271 = vmatpush1.bf16.msra.mxu0 %v1249
        %1272 = vmatprep.subr.bf16.mxu0 0
        %1273 = vmatpush1.bf16.msra.mxu0 %v1250
        %1274 = vmatprep.subr.bf16.mxu0 0
        %1275 = vmatpush1.bf16.msra.mxu0 %v1251
        %1276 = vmatprep.subr.bf16.mxu0 0
        %1277 = vmatpush1.bf16.msra.mxu0 0
        %1278 = vmatprep.subr.bf16.mxu0 0
        %1279 = vmatpush1.bf16.msra.mxu0 0
        %1280 = vmatprep.subr.bf16.mxu0 0
        %1281 = vmatpush1.bf16.msra.mxu0 0
        %1282 = vmatprep.subr.bf16.mxu0 0
        %1283 = vmatpush1.bf16.msra.mxu0 0
        %1284 = vmatprep.subr.bf16.mxu0 0
        %1285 = vmatpush1.bf16.msra.mxu0 0
        %1286 = vmatprep.subr.bf16.mxu0 0
        %1287 = vmatpush1.bf16.msra.mxu0 0
        %1288 = vmatprep.subr.bf16.mxu0 0
        %1289 = vmatpush1.bf16.msra.mxu0 0
        %1290 = vmatprep.subr.bf16.mxu0 0
        %1291 = vmatpush1.bf16.msra.mxu0 0
        %1292 = vmatprep.mubr.bf16.mxu0 0
        %1293 = vmatmul.mubr.bf16.gmra.mrb[0].mxu0 %v1188
        %v1294 = vpop.f32.mrb[0].mxu0
        %v1295 = vadd.f32 %v1210, %v1294
        %v1296 = vpop.f32.mrb[0].mxu0
        %v1297 = vpop.f32.mrb[0].mxu0
        %v1298 = vadd.f32 %v1210, %v1297
        %v1299 = vpop.f32.mrb[0].mxu0
        %1300 = vdwg.mxu0
        %v1301 = vmax.f32 %v1295, 0.0
        %v1302 = vmax.f32 %v1298, 0.0
        %v1303 = vpack.c.bf16 %v1302, %v1301
        %v1304 = vld [vmem:[#allocation10] sm:$0xf]
        %v1305 = vld [vmem:[#allocation10 + $0x4] sm:$0xf]
        %v1306 = vld [vmem:[#allocation10 + $0x8] sm:$0xf]
        %v1307 = vld [vmem:[#allocation10 + $0xc] sm:$0xf]
        %v1308 = vld [vmem:[#allocation10 + $0x10] sm:$0xf]
        %v1309 = vld [vmem:[#allocation10 + $0x14] sm:$0xf]
        %v1310 = vld [vmem:[#allocation10 + $0x18] sm:$0xf]
        %v1311 = vld [vmem:[#allocation10 + $0x1c] sm:$0xf]
        %v1312 = vld [vmem:[#allocation10 + $0x20] sm:$0xf]
        %v1313 = vld [vmem:[#allocation10 + $0x24] sm:$0xf]
        %v1314 = vld [vmem:[#allocation10 + $0x28] sm:$0xf]
        %v1315 = vld [vmem:[#allocation10 + $0x2c] sm:$0xf]
        %v1316 = vld [vmem:[#allocation10 + $0x30] sm:$0xf]
        %v1317 = vld [vmem:[#allocation10 + $0x34] sm:$0xf]
        %v1318 = vld [vmem:[#allocation10 + $0x38] sm:$0xf]
        %v1319 = vld [vmem:[#allocation10 + $0x3c] sm:$0xf]
        %v1320 = vld [vmem:[%s10] sm:$0x1]
        %v1322 = vlaneseq
        %v1323 = vshrl.u32 %v1322, 7
        %v1324 = vsub.s32 0, %v1323
        %v1325 = vrot.slane %v1320, %v1324
        %v1343 = vunpack.c.l.b16 %v1304
        %v1344 = vunpack.c.l.b16 %v1305
        %v1345 = vunpack.c.l.b16 %v1306
        %v1346 = vunpack.c.l.b16 %v1307
        %v1347 = vunpack.c.l.b16 %v1308
        %v1348 = vunpack.c.l.b16 %v1309
        %v1349 = vunpack.c.l.b16 %v1310
        %v1350 = vunpack.c.l.b16 %v1311
        %v1351 = vunpack.c.l.b16 %v1312
        %v1352 = vunpack.c.l.b16 %v1313
        %v1353 = vunpack.c.l.b16 %v1314
        %v1354 = vunpack.c.l.b16 %v1315
        %v1355 = vunpack.c.l.b16 %v1316
        %v1356 = vunpack.c.l.b16 %v1317
        %v1357 = vunpack.c.l.b16 %v1318
        %v1358 = vunpack.c.l.b16 %v1319
        %v1359 = vpack.c.b16 %v1344, %v1343
        %v1360 = vpack.c.b16 %v1346, %v1345
        %v1361 = vpack.c.b16 %v1348, %v1347
        %v1362 = vpack.c.b16 %v1350, %v1349
        %v1363 = vpack.c.b16 %v1352, %v1351
        %v1364 = vpack.c.b16 %v1354, %v1353
        %v1365 = vpack.c.b16 %v1356, %v1355
        %v1366 = vpack.c.b16 %v1358, %v1357
        %1375 = vmatprep.subr.bf16.mxu0 0
        %1376 = vmatpush1.bf16.msra.mxu0 %v1359
        %1377 = vmatprep.subr.bf16.mxu0 0
        %1378 = vmatpush1.bf16.msra.mxu0 %v1360
        %1379 = vmatprep.subr.bf16.mxu0 0
        %1380 = vmatpush1.bf16.msra.mxu0 %v1361
        %1381 = vmatprep.subr.bf16.mxu0 0
        %1382 = vmatpush1.bf16.msra.mxu0 %v1362
        %1383 = vmatprep.subr.bf16.mxu0 0
        %1384 = vmatpush1.bf16.msra.mxu0 %v1363
        %1385 = vmatprep.subr.bf16.mxu0 0
        %1386 = vmatpush1.bf16.msra.mxu0 %v1364
        %1387 = vmatprep.subr.bf16.mxu0 0
        %1388 = vmatpush1.bf16.msra.mxu0 %v1365
        %1389 = vmatprep.subr.bf16.mxu0 0
        %1390 = vmatpush1.bf16.msra.mxu0 %v1366
        %1391 = vmatprep.subr.bf16.mxu0 0
        %1392 = vmatpush1.bf16.msra.mxu0 0
        %1393 = vmatprep.subr.bf16.mxu0 0
        %1394 = vmatpush1.bf16.msra.mxu0 0
        %1395 = vmatprep.subr.bf16.mxu0 0
        %1396 = vmatpush1.bf16.msra.mxu0 0
        %1397 = vmatprep.subr.bf16.mxu0 0
        %1398 = vmatpush1.bf16.msra.mxu0 0
        %1399 = vmatprep.subr.bf16.mxu0 0
        %1400 = vmatpush1.bf16.msra.mxu0 0
        %1401 = vmatprep.subr.bf16.mxu0 0
        %1402 = vmatpush1.bf16.msra.mxu0 0
        %1403 = vmatprep.subr.bf16.mxu0 0
        %1404 = vmatpush1.bf16.msra.mxu0 0
        %1405 = vmatprep.subr.bf16.mxu0 0
        %1406 = vmatpush1.bf16.msra.mxu0 0
        %1407 = vmatprep.mubr.bf16.mxu0 0
        %1408 = vmatmul.mubr.bf16.gmra.mrb[0].mxu0 %v1303
        %v1409 = vpop.f32.mrb[0].mxu0
        %v1410 = vadd.f32 %v1325, %v1409
        %v1411 = vpop.f32.mrb[0].mxu0
        %v1412 = vpop.f32.mrb[0].mxu0
        %v1413 = vadd.f32 %v1325, %v1412
        %v1414 = vpop.f32.mrb[0].mxu0
        %1415 = vdwg.mxu0
        %v1416 = vmax.f32 %v1410, 0.0
        %v1417 = vmax.f32 %v1413, 0.0
        %v1418 = vpack.c.bf16 %v1417, %v1416
        %v1419 = vld [vmem:[#allocation11] sm:$0xff]
        %v1420 = vld [vmem:[#allocation11 + $0x8] sm:$0xff]
        %v1421 = vld [vmem:[#allocation11 + $0x10] sm:$0xff]
        %v1422 = vld [vmem:[#allocation11 + $0x18] sm:$0xff]
        %v1423 = vld [vmem:[#allocation11 + $0x20] sm:$0xff]
        %v1424 = vld [vmem:[#allocation11 + $0x28] sm:$0xff]
        %v1425 = vld [vmem:[#allocation11 + $0x30] sm:$0xff]
        %v1426 = vld [vmem:[#allocation11 + $0x38] sm:$0xff]
        %v1427 = vld [vmem:[#allocation11 + $0x40] sm:$0xff]
        %v1428 = vld [vmem:[#allocation11 + $0x48] sm:$0xff]
        %v1429 = vld [vmem:[#allocation11 + $0x50] sm:$0xff]
        %v1430 = vld [vmem:[#allocation11 + $0x58] sm:$0xff]
        %v1431 = vld [vmem:[#allocation11 + $0x60] sm:$0xff]
        %v1432 = vld [vmem:[#allocation11 + $0x68] sm:$0xff]
        %v1433 = vld [vmem:[#allocation11 + $0x70] sm:$0xff]
        %v1434 = vld [vmem:[#allocation11 + $0x78] sm:$0xff]
        %v1435 = vld [vmem:[%s12] sm:$0x3]
        %v1437 = vlaneseq
        %v1438 = vshrl.u32 %v1437, 7
        %v1439 = vsub.s32 0, %v1438
        %v1440 = vrot.slane %v1435, %v1439
        %v1441 = vlaneseq
        %v1442 = vshrl.u32 %v1441, 7
        %v1443 = vsub.s32 1, %v1442
        %v1444 = vrot.slane %v1435, %v1443
        %v1463 = vunpack.c.l.b16 %v1419
        %v1464 = vunpack.c.h.b16 %v1419
        %v1465 = vunpack.c.l.b16 %v1420
        %v1466 = vunpack.c.h.b16 %v1420
        %v1467 = vunpack.c.l.b16 %v1421
        %v1468 = vunpack.c.h.b16 %v1421
        %v1469 = vunpack.c.l.b16 %v1422
        %v1470 = vunpack.c.h.b16 %v1422
        %v1471 = vunpack.c.l.b16 %v1423
        %v1472 = vunpack.c.h.b16 %v1423
        %v1473 = vunpack.c.l.b16 %v1424
        %v1474 = vunpack.c.h.b16 %v1424
        %v1475 = vunpack.c.l.b16 %v1425
        %v1476 = vunpack.c.h.b16 %v1425
        %v1477 = vunpack.c.l.b16 %v1426
        %v1478 = vunpack.c.h.b16 %v1426
        %v1479 = vunpack.c.l.b16 %v1427
        %v1480 = vunpack.c.h.b16 %v1427
        %v1481 = vunpack.c.l.b16 %v1428
        %v1482 = vunpack.c.h.b16 %v1428
        %v1483 = vunpack.c.l.b16 %v1429
        %v1484 = vunpack.c.h.b16 %v1429
        %v1485 = vunpack.c.l.b16 %v1430
        %v1486 = vunpack.c.h.b16 %v1430
        %v1487 = vunpack.c.l.b16 %v1431
        %v1488 = vunpack.c.h.b16 %v1431
        %v1489 = vunpack.c.l.b16 %v1432
        %v1490 = vunpack.c.h.b16 %v1432
        %v1491 = vunpack.c.l.b16 %v1433
        %v1492 = vunpack.c.h.b16 %v1433
        %v1493 = vunpack.c.l.b16 %v1434
        %v1494 = vunpack.c.h.b16 %v1434
        %v1495 = vpack.c.b16 %v1465, %v1463
        %v1496 = vpack.c.b16 %v1466, %v1464
        %v1497 = vpack.c.b16 %v1469, %v1467
        %v1498 = vpack.c.b16 %v1470, %v1468
        %v1499 = vpack.c.b16 %v1473, %v1471
        %v1500 = vpack.c.b16 %v1474, %v1472
        %v1501 = vpack.c.b16 %v1477, %v1475
        %v1502 = vpack.c.b16 %v1478, %v1476
        %v1503 = vpack.c.b16 %v1481, %v1479
        %v1504 = vpack.c.b16 %v1482, %v1480
        %v1505 = vpack.c.b16 %v1485, %v1483
        %v1506 = vpack.c.b16 %v1486, %v1484
        %v1507 = vpack.c.b16 %v1489, %v1487
        %v1508 = vpack.c.b16 %v1490, %v1488
        %v1509 = vpack.c.b16 %v1493, %v1491
        %v1510 = vpack.c.b16 %v1494, %v1492
        %1527 = vmatprep.subr.bf16.mxu0 %v1496
        %1528 = vmatpush1.bf16.msra.mxu0 %v1495
        %1529 = vmatprep.subr.bf16.mxu0 %v1498
        %1530 = vmatpush1.bf16.msra.mxu0 %v1497
        %1531 = vmatprep.subr.bf16.mxu0 %v1500
        %1532 = vmatpush1.bf16.msra.mxu0 %v1499
        %1533 = vmatprep.subr.bf16.mxu0 %v1502
        %1534 = vmatpush1.bf16.msra.mxu0 %v1501
        %1535 = vmatprep.subr.bf16.mxu0 %v1504
        %1536 = vmatpush1.bf16.msra.mxu0 %v1503
        %1537 = vmatprep.subr.bf16.mxu0 %v1506
        %1538 = vmatpush1.bf16.msra.mxu0 %v1505
        %1539 = vmatprep.subr.bf16.mxu0 %v1508
        %1540 = vmatpush1.bf16.msra.mxu0 %v1507
        %1541 = vmatprep.subr.bf16.mxu0 %v1510
        %1542 = vmatpush1.bf16.msra.mxu0 %v1509
        %1543 = vmatprep.subr.bf16.mxu0 0
        %1544 = vmatpush1.bf16.msra.mxu0 0
        %1545 = vmatprep.subr.bf16.mxu0 0
        %1546 = vmatpush1.bf16.msra.mxu0 0
        %1547 = vmatprep.subr.bf16.mxu0 0
        %1548 = vmatpush1.bf16.msra.mxu0 0
        %1549 = vmatprep.subr.bf16.mxu0 0
        %1550 = vmatpush1.bf16.msra.mxu0 0
        %1551 = vmatprep.subr.bf16.mxu0 0
        %1552 = vmatpush1.bf16.msra.mxu0 0
        %1553 = vmatprep.subr.bf16.mxu0 0
        %1554 = vmatpush1.bf16.msra.mxu0 0
        %1555 = vmatprep.subr.bf16.mxu0 0
        %1556 = vmatpush1.bf16.msra.mxu0 0
        %1557 = vmatprep.subr.bf16.mxu0 0
        %1558 = vmatpush1.bf16.msra.mxu0 0
        %1559 = vmatprep.mubr.bf16.mxu0 0
        %1560 = vmatmul.mubr.bf16.gmra.mrb[0].mxu0 %v1418
        %v1561 = vpop.f32.mrb[0].mxu0
        %v1562 = vadd.f32 %v1440, %v1561
        %v1563 = vpop.f32.mrb[0].mxu0
        %v1564 = vadd.f32 %v1444, %v1563
        %v1565 = vpop.f32.mrb[0].mxu0
        %v1566 = vadd.f32 %v1440, %v1565
        %v1567 = vpop.f32.mrb[0].mxu0
        %v1568 = vadd.f32 %v1444, %v1567
        %1569 = vdwg.mxu0
        %v1570 = vmax.f32 %v1562, 0.0
        %v1571 = vmax.f32 %v1564, 0.0
        %v1572 = vmax.f32 %v1566, 0.0
        %v1573 = vmax.f32 %v1568, 0.0
        %v1574 = vadd.f32 %v1570, %v758
        %v1575 = vadd.f32 %v1571, %v833
        %v1576 = vadd.f32 %v1572, %v764
        %v1577 = vadd.f32 %v1573, %v838
        %1578 = vst [vmem:[%s517] sm:$0xff] %v1574
        %1579 = vst [vmem:[%s517 + $0x8] sm:$0xff] %v1575
        %1580 = vst [vmem:[%s517 + $0x10] sm:$0xff] %v1576
        %1581 = vst [vmem:[%s517 + $0x18] sm:$0xff] %v1577
        %s1582 = sand.u32 %s317, 1
        %s1583 = scalar_lea.sflag [#allocation4], %s1582
        %s1584 = sand.u32 %s317, 1
        %s1585 = smul.addr %s1584, 32
        %s1586 = scalar_lea.vmem [#allocation13], %s1585
        // Predicated region
        $region97: #{tpu_custom_call.1} parent=71 // pred_check
          %p1587 = pneg %p327
        $region98: #{tpu_custom_call.1} parent=71 // pred_check_branch
          %1589 = sbr.rel (%p1587) target = $region100
        $region99: #{tpu_custom_call.1} parent=71 // pred_region
          %s1591 = ssub.s32 512, 512
          %1592 = vsyncadd %s1583, %s1591
          %s1593 = smul.addr %s31, 4
          %s1594 = smul.addr %s1593, 128
          %s1595 = scalar_lea.hbm %s13, %s1594
          %s1596 = sshll.u32 %s1586, 4
          %s1597 = int_to_ptr.vmem [resolvable:$true] %s1596
          %1602 = dma.vmem_to_hbm [thread:$0]  %s1597, 512, %s1595, %s1583, 256, 256, 16
        $region100: #{tpu_custom_call.1} parent=71 // pred_fallthru
          _
      $region72: #{tpu_custom_call.1} parent=5 // pred_fallthru
        _
      %p1603 = scmp.le.s32.totalorder 2, %s26
      // Predicated region
      $region101: #{tpu_custom_call.1} parent=5 // pred_check
        %p1604 = pneg %p1603
      $region102: #{tpu_custom_call.1} parent=5 // pred_check_branch
        %1606 = sbr.rel (%p1604) target = $region104
      $region103: #{tpu_custom_call.1} parent=5 // pred_region
        %s1607 = ssub.s32 %s26, 2
        // Predicated region
        $region105: #{tpu_custom_call.1} parent=103 // pred_check
          %p1608 = pneg %p333
        $region106: #{tpu_custom_call.1} parent=103 // pred_check_branch
          %1610 = sbr.rel (%p1608) target = $region108
        $region107: #{tpu_custom_call.1} parent=103 // pred_region
          %s1611 = sand.u32 %s318, 1
          %s1612 = scalar_lea.sflag [#allocation4], %s1611
          %s1613 = sand.u32 %s318, 1
          %s1614 = smul.addr %s1613, 32
          %s1615 = scalar_lea.vmem [#allocation13], %s1614
          %1616 = dma.done %s1612, 512
        $region108: #{tpu_custom_call.1} parent=103 // pred_fallthru
          _
      $region104: #{tpu_custom_call.1} parent=5 // pred_fallthru
        _
    $region6: #{tpu_custom_call.1} parent=1 // loop_footer
      %s30 = sadd.s32 1, %s26
    $region7: #{tpu_custom_call.1} parent=1 // loop_footer_branch
      %25 = sbr.rel target = $region3
    $region8: #{tpu_custom_call.1} parent=1 // loop_exit
      _
    %1617 = vsyncpa [#allocation3], 1
    %s1618 = scalar_lea.sflag [#allocation3], 1
    %1619 = vsyncpa %s1618, 1
    %1620 = vsyncpa [#allocation6], 1
    %1621 = vsyncpa [#allocation9], 1
    %1622 = vsyncpa [#allocation12], 1
    %1623 = vsyncpa [#allocation4], 1
    %s1624 = scalar_lea.sflag [#allocation4], 1
    %1625 = vsyncpa %s1624, 1

</llo_original>
